<compile_context>
chip_gen: v5e
topology: v5e:2x2
jax: 0.10.0
libtpu: 0.0.40
codegen_flags: <defaults>
</compile_context>

<pallas_src>
import functools

import jax
import jax.numpy as jnp
from jax.experimental import pallas as pl
from jax.experimental.pallas import tpu as pltpu


def _attention_kernel(x_ref, wqkv_ref, bqkv_ref, wproj_ref, bproj_ref, o_ref,
                      *, num_heads):
    # x_ref block: (1, N, C) in bf16
    xb = x_ref[0]                                           # (N, C) bf16
    n, c = xb.shape
    hd = c // num_heads

    # ---- QKV projection: one big MXU matmul, f32 accumulation ----
    # (softmax scale is already folded into the q columns of wqkv/bqkv)
    qkv = jnp.dot(xb, wqkv_ref[...],
                  preferred_element_type=jnp.float32)       # (N, 3C) f32
    qkv = (qkv + bqkv_ref[0]).astype(jnp.bfloat16)          # (N, 3C) bf16

    def split_heads(m):                                     # (N, C) -> (H, N, hd)
        return m.reshape(n, num_heads, hd).transpose(1, 0, 2)

    q = split_heads(qkv[:, :c])                             # (H, N, hd) bf16
    k = split_heads(qkv[:, c:2 * c])                        # (H, N, hd) bf16
    v = split_heads(qkv[:, 2 * c:])                         # (H, N, hd) bf16

    # ---- batched scaled dot-product attention over heads (bf16 MXU, f32 acc) ----
    s = jnp.einsum('hnd,hmd->hnm', q, k,
                   preferred_element_type=jnp.float32)      # (H, N, N) f32

    # softmax (kept in f32; EUP reciprocal for the denominator)
    s = s - jnp.max(s, axis=-1, keepdims=True)
    p = jnp.exp(s)
    p = p * pl.reciprocal(jnp.sum(p, axis=-1, keepdims=True), approx=True)

    ctx = jnp.einsum('hnm,hmd->hnd', p.astype(jnp.bfloat16), v,
                     preferred_element_type=jnp.float32)    # (H, N, hd) f32

    # head merge in bf16 (half the relayout bytes), then output projection.
    ctx = ctx.astype(jnp.bfloat16).transpose(1, 0, 2).reshape(n, c)   # (N, C) bf16
    out = jnp.dot(ctx, wproj_ref[...],
                  preferred_element_type=jnp.float32) + bproj_ref[0]
    o_ref[0] = out.astype(o_ref.dtype)


def attention_forward(x, w_qkv, b_qkv, w_proj, b_proj, *, num_heads):
    """x: (B, N, C). w_qkv: (C, 3C). b_qkv: (3C,). w_proj: (C, C). b_proj: (C,)."""
    B, N, C = x.shape
    scale = float(C) ** (-0.5)          # matches the PyTorch module (dim ** -0.5)
    out_dtype = x.dtype                 # echo input dtype (use bf16 here if the
                                        # consumer accepts it: halves writeback DMA)

    # Fold softmax scale into the q-part of the QKV projection (one-time
    # parameter transform, removes per-step N*C multiplies in the kernel).
    w_qkv_f = jnp.asarray(w_qkv, jnp.float32).at[:, :C].multiply(scale)
    b_qkv_f = jnp.asarray(b_qkv, jnp.float32).at[:C].multiply(scale)

    # bf16 operands for the MXU (also halves weight/activation DMA bytes);
    # biases stay f32 and are added after f32 accumulation.
    x_bf = x.astype(jnp.bfloat16)
    w_qkv_bf = w_qkv_f.astype(jnp.bfloat16)
    w_proj_bf = jnp.asarray(w_proj, jnp.float32).astype(jnp.bfloat16)
    b_qkv2 = b_qkv_f.reshape(1, 3 * C)
    b_proj2 = jnp.asarray(b_proj, jnp.float32).reshape(1, C)

    kernel = functools.partial(_attention_kernel, num_heads=num_heads)

    # Weights/biases are grid-invariant: single-buffer them (no double-buffer VMEM).
    resident = pl.Buffered(1)

    return pl.pallas_call(
        kernel,
        out_shape=jax.ShapeDtypeStruct((B, N, C), out_dtype),
        grid_spec=pltpu.PrefetchScalarGridSpec(
            num_scalar_prefetch=0,
            grid=(B,),
            in_specs=[
                pl.BlockSpec((1, N, C), lambda b: (b, 0, 0)),                       # x
                pl.BlockSpec((C, 3 * C), lambda b: (0, 0), pipeline_mode=resident),  # w_qkv
                pl.BlockSpec((1, 3 * C), lambda b: (0, 0), pipeline_mode=resident),  # b_qkv
                pl.BlockSpec((C, C), lambda b: (0, 0), pipeline_mode=resident),      # w_proj
                pl.BlockSpec((1, C), lambda b: (0, 0), pipeline_mode=resident),      # b_proj
            ],
            out_specs=pl.BlockSpec((1, N, C), lambda b: (b, 0, 0)),
        ),
        compiler_params=pltpu.CompilerParams(
            dimension_semantics=("parallel",),
            vmem_limit_bytes=40 * 1024 * 1024,
        ),
    )(x_bf, w_qkv_bf, b_qkv2, w_proj_bf, b_proj2)


def attention_reference(x, w_qkv, b_qkv, w_proj, b_proj, *, num_heads):
    """Pure-JAX f32 reference mirroring the PyTorch forward."""
    B, N, C = x.shape
    hd = C // num_heads
    scale = float(C) ** (-0.5)
    qkv = x @ w_qkv + b_qkv                                    # (B, N, 3C)
    qkv = qkv.reshape(B, N, 3, num_heads, hd).transpose(2, 0, 3, 1, 4)
    q, k, v = qkv[0], qkv[1], qkv[2]                           # (B, H, N, hd)
    attn = jnp.einsum("bhnd,bhmd->bhnm", q, k) * scale
    attn = jax.nn.softmax(attn, axis=-1)
    out = jnp.einsum("bhnm,bhmd->bhnd", attn, v)               # (B, H, N, hd)
    out = out.transpose(0, 2, 1, 3).reshape(B, N, C)
    return out @ w_proj + b_proj


if __name__ == "__main__":
    # Small but TPU-friendly shapes: N multiple of 8, C multiple of 128 (lane-dense).
    B, N, C = 2, 16, 128
    num_heads = 4

    key = jax.random.PRNGKey(0)
    kx, kw1, kb1, kw2, kb2 = jax.random.split(key, 5)

    x = jax.random.normal(kx, (B, N, C), dtype=jnp.float32)
    # nn.Linear-like init; weights stored pre-transposed as (in, out).
    w_qkv = jax.random.normal(kw1, (C, 3 * C), dtype=jnp.float32) * (C ** -0.5)
    b_qkv = jax.random.normal(kb1, (3 * C,), dtype=jnp.float32) * 0.02
    w_proj = jax.random.normal(kw2, (C, C), dtype=jnp.float32) * (C ** -0.5)
    b_proj = jax.random.normal(kb2, (C,), dtype=jnp.float32) * 0.02

    out = attention_forward(x, w_qkv, b_qkv, w_proj, b_proj, num_heads=num_heads)
    out = jax.block_until_ready(out)

    ref = attention_reference(x, w_qkv, b_qkv, w_proj, b_proj, num_heads=num_heads)
    assert out.shape == (B, N, C)
    max_err = float(jnp.max(jnp.abs(out - ref)))
    # bf16 matmul operands vs f32 reference -> loose-but-meaningful tolerance.
    assert jnp.allclose(out, ref, atol=5e-2, rtol=5e-2), \
        f"mismatch vs reference (max abs err {max_err})"

    print("KERNEL_OK")
</pallas_src>

<mosaic_0001>
module attributes {stable_mosaic.version = 11 : i64} {
  func.func @_attention_kernel(%arg0: i32, %arg1: memref<1x16x128xbf16, #tpu.memory_space<vmem>>, %arg2: memref<128x384xbf16, #tpu.memory_space<vmem>>, %arg3: memref<1x384xf32, #tpu.memory_space<vmem>>, %arg4: memref<128x128xbf16, #tpu.memory_space<vmem>>, %arg5: memref<1x128xf32, #tpu.memory_space<vmem>>, %arg6: memref<1x16x128xf32, #tpu.memory_space<vmem>>) attributes {dimension_semantics = [#tpu.dimension_semantics<parallel>], iteration_bounds = array<i64: 2>, scalar_prefetch = 0 : i64, scratch_operands = 0 : i64, tpu.core_type = #tpu.core_type<tc>, window_params = [{transform_indices = @transform_0, window_bounds = array<i64: 1, 16, 128>}, {pipeline_mode = #tpu.pipeline_mode<synchronous>, transform_indices = @transform_1, window_bounds = array<i64: 128, 384>}, {pipeline_mode = #tpu.pipeline_mode<synchronous>, transform_indices = @transform_2, window_bounds = array<i64: 1, 384>}, {pipeline_mode = #tpu.pipeline_mode<synchronous>, transform_indices = @transform_3, window_bounds = array<i64: 128, 128>}, {pipeline_mode = #tpu.pipeline_mode<synchronous>, transform_indices = @transform_4, window_bounds = array<i64: 1, 128>}, {transform_indices = @transform_5, window_bounds = array<i64: 1, 16, 128>}]} {
    %c0 = arith.constant 0 : index
    %c0_0 = arith.constant 0 : index
    %c0_1 = arith.constant 0 : index
    %0 = vector.load %arg1[%c0, %c0_0, %c0_1] : memref<1x16x128xbf16, #tpu.memory_space<vmem>>, vector<1x16x128xbf16>
    %1 = vector.shape_cast %0 : vector<1x16x128xbf16> to vector<16x128xbf16>
    %c0_2 = arith.constant 0 : index
    %c0_3 = arith.constant 0 : index
    %2 = vector.load %arg2[%c0_2, %c0_3] : memref<128x384xbf16, #tpu.memory_space<vmem>>, vector<128x384xbf16>
    %cst = arith.constant dense<0.000000e+00> : vector<16x384xf32>
    %3 = tpu.matmul %1, %2, %cst {dimension_numbers = #tpu.dot_dimension_numbers<[1], [0], [0], [1], [0, 0, 1, 1], [], []>} : vector<16x128xbf16>, vector<128x384xbf16>, vector<16x384xf32> -> vector<16x384xf32>
    %c0_4 = arith.constant 0 : index
    %c0_5 = arith.constant 0 : index
    %4 = vector.load %arg3[%c0_4, %c0_5] : memref<1x384xf32, #tpu.memory_space<vmem>>, vector<1x384xf32>
    %5 = vector.shape_cast %4 : vector<1x384xf32> to vector<384xf32>
    %6 = vector.shape_cast %5 : vector<384xf32> to vector<1x384xf32>
    %7 = vector.broadcast %6 : vector<1x384xf32> to vector<16x384xf32>
    %8 = arith.addf %3, %7 : vector<16x384xf32>
    %9 = arith.truncf %8 : vector<16x384xf32> to vector<16x384xbf16>
    %10 = vector.extract_strided_slice %9 {offsets = [0, 0], sizes = [16, 128], strides = [1, 1]} : vector<16x384xbf16> to vector<16x128xbf16>
    %11 = vector.shape_cast %10 : vector<16x128xbf16> to vector<16x4x32xbf16>
    %12 = tpu.transpose %11, [1, 0, 2] : vector<16x4x32xbf16> -> vector<4x16x32xbf16>
    %13 = vector.extract_strided_slice %9 {offsets = [0, 128], sizes = [16, 128], strides = [1, 1]} : vector<16x384xbf16> to vector<16x128xbf16>
    %14 = vector.shape_cast %13 : vector<16x128xbf16> to vector<16x4x32xbf16>
    %15 = tpu.transpose %14, [1, 0, 2] : vector<16x4x32xbf16> -> vector<4x16x32xbf16>
    %16 = vector.extract_strided_slice %9 {offsets = [0, 256], sizes = [16, 128], strides = [1, 1]} : vector<16x384xbf16> to vector<16x128xbf16>
    %17 = vector.shape_cast %16 : vector<16x128xbf16> to vector<16x4x32xbf16>
    %18 = tpu.transpose %17, [1, 0, 2] : vector<16x4x32xbf16> -> vector<4x16x32xbf16>
    "tpu.trace_start"() <{level = 10 : i32, message = "hnd,hmd->hnm"}> : () -> ()
    %cst_6 = arith.constant dense<0.000000e+00> : vector<4x16x16xf32>
    %19 = tpu.matmul %12, %15, %cst_6 {dimension_numbers = #tpu.dot_dimension_numbers<[2], [2], [1], [1], [0, 0, 0, 1, 1, 1], [0], [0]>} : vector<4x16x32xbf16>, vector<4x16x32xbf16>, vector<4x16x16xf32> -> vector<4x16x16xf32>
    "tpu.trace_stop"() : () -> ()
    %cst_7 = arith.constant dense<0xFF800000> : vector<4x16xf32>
    %20 = vector.multi_reduction <maximumf>, %19, %cst_7 [2] : vector<4x16x16xf32> to vector<4x16xf32>
    %21 = vector.shape_cast %20 : vector<4x16xf32> to vector<4x16x1xf32>
    %22 = vector.broadcast %21 : vector<4x16x1xf32> to vector<4x16x16xf32>
    %23 = arith.subf %19, %22 : vector<4x16x16xf32>
    %24 = math.exp %23 : vector<4x16x16xf32>
    %cst_8 = arith.constant dense<0.000000e+00> : vector<4x16xf32>
    %25 = vector.multi_reduction <add>, %24, %cst_8 [2] : vector<4x16x16xf32> to vector<4x16xf32>
    %26 = vector.shape_cast %25 : vector<4x16xf32> to vector<4x16x1xf32>
    %27 = tpu.reciprocal %26 {approx = true} : vector<4x16x1xf32> -> vector<4x16x1xf32>
    %28 = vector.broadcast %27 : vector<4x16x1xf32> to vector<4x16x16xf32>
    %29 = arith.mulf %24, %28 : vector<4x16x16xf32>
    %30 = arith.truncf %29 : vector<4x16x16xf32> to vector<4x16x16xbf16>
    "tpu.trace_start"() <{level = 10 : i32, message = "hnm,hmd->hnd"}> : () -> ()
    %cst_9 = arith.constant dense<0.000000e+00> : vector<4x16x32xf32>
    %31 = tpu.matmul %30, %18, %cst_9 {dimension_numbers = #tpu.dot_dimension_numbers<[2], [1], [1], [2], [0, 0, 0, 1, 1, 2], [0], [0]>} : vector<4x16x16xbf16>, vector<4x16x32xbf16>, vector<4x16x32xf32> -> vector<4x16x32xf32>
    "tpu.trace_stop"() : () -> ()
    %32 = arith.truncf %31 : vector<4x16x32xf32> to vector<4x16x32xbf16>
    %33 = tpu.transpose %32, [1, 0, 2] : vector<4x16x32xbf16> -> vector<16x4x32xbf16>
    %34 = vector.shape_cast %33 : vector<16x4x32xbf16> to vector<16x128xbf16>
    %c0_10 = arith.constant 0 : index
    %c0_11 = arith.constant 0 : index
    %35 = vector.load %arg4[%c0_10, %c0_11] : memref<128x128xbf16, #tpu.memory_space<vmem>>, vector<128x128xbf16>
    %cst_12 = arith.constant dense<0.000000e+00> : vector<16x128xf32>
    %36 = tpu.matmul %34, %35, %cst_12 {dimension_numbers = #tpu.dot_dimension_numbers<[1], [0], [0], [1], [0, 0, 1, 1], [], []>} : vector<16x128xbf16>, vector<128x128xbf16>, vector<16x128xf32> -> vector<16x128xf32>
    %c0_13 = arith.constant 0 : index
    %c0_14 = arith.constant 0 : index
    %37 = vector.load %arg5[%c0_13, %c0_14] : memref<1x128xf32, #tpu.memory_space<vmem>>, vector<1x128xf32>
    %38 = vector.shape_cast %37 : vector<1x128xf32> to vector<128xf32>
    %39 = vector.shape_cast %38 : vector<128xf32> to vector<1x128xf32>
    %40 = vector.broadcast %39 : vector<1x128xf32> to vector<16x128xf32>
    %41 = arith.addf %36, %40 : vector<16x128xf32>
    %c0_15 = arith.constant 0 : index
    %c0_16 = arith.constant 0 : index
    %c0_17 = arith.constant 0 : index
    %42 = vector.load %arg6[%c0_15, %c0_16, %c0_17] : memref<1x16x128xf32, #tpu.memory_space<vmem>>, vector<1x16x128xf32>
    %43 = vector.shape_cast %42 : vector<1x16x128xf32> to vector<16x128xf32>
    %44 = vector.shape_cast %41 : vector<16x128xf32> to vector<1x16x128xf32>
    tpu.vector_store %arg6[%c0_15, %c0_16, %c0_17], %44 {strides = array<i32>} : memref<1x16x128xf32, #tpu.memory_space<vmem>>, vector<1x16x128xf32>,
    return
  }
  func.func @transform_0(%arg0: i32) -> (i32, i32, i32) {
    %c0_i32 = arith.constant 0 : i32
    %c0_i32_0 = arith.constant 0 : i32
    %c0_i32_1 = arith.constant 0 : i32
    return %arg0, %c0_i32, %c0_i32_0 : i32, i32, i32
  }
  func.func @transform_1(%arg0: i32) -> (i32, i32) {
    %c0_i32 = arith.constant 0 : i32
    %c0_i32_0 = arith.constant 0 : i32
    %c0_i32_1 = arith.constant 0 : i32
    return %c0_i32, %c0_i32_0 : i32, i32
  }
  func.func @transform_2(%arg0: i32) -> (i32, i32) {
    %c0_i32 = arith.constant 0 : i32
    %c0_i32_0 = arith.constant 0 : i32
    %c0_i32_1 = arith.constant 0 : i32
    return %c0_i32, %c0_i32_0 : i32, i32
  }
  func.func @transform_3(%arg0: i32) -> (i32, i32) {
    %c0_i32 = arith.constant 0 : i32
    %c0_i32_0 = arith.constant 0 : i32
    %c0_i32_1 = arith.constant 0 : i32
    return %c0_i32, %c0_i32_0 : i32, i32
  }
  func.func @transform_4(%arg0: i32) -> (i32, i32) {
    %c0_i32 = arith.constant 0 : i32
    %c0_i32_0 = arith.constant 0 : i32
    %c0_i32_1 = arith.constant 0 : i32
    return %c0_i32, %c0_i32_0 : i32, i32
  }
  func.func @transform_5(%arg0: i32) -> (i32, i32, i32) {
    %c0_i32 = arith.constant 0 : i32
    %c0_i32_0 = arith.constant 0 : i32
    %c0_i32_1 = arith.constant 0 : i32
    return %arg0, %c0_i32, %c0_i32_0 : i32, i32, i32
  }
}

</mosaic_0001>

<llo_original>
// kernel: tpu_custom_call.1
$region0: #{tpu_custom_call.1}
  #allocation0 [shape = 'u32[]', space=smem, size = 0x4, offset = 0x4, fixed_abs, tag = 'smem constant byte address 0x4 - core index']
  #allocation1 [shape = 'u32[72,128]{1,0:T(1,128)}', space=vmem, size = 0x9000, scoped, tag = 'internal scratch']
  %s0 = inlined_call_operand.hbm [shape: bf16[2,16,128], index: 0, kind: input, shape index: {}]
  %s1 = inlined_call_operand.hbm [shape: bf16[128,384], index: 1, kind: input, shape index: {}]
  %s2 = inlined_call_operand.hbm [shape: f32[1,384], index: 2, kind: input, shape index: {}]
  %s3 = inlined_call_operand.hbm [shape: bf16[128,128], index: 3, kind: input, shape index: {}]
  %s4 = inlined_call_operand.vmem [shape: f32[1,128], index: 4, kind: input, shape index: {}]
  %s5 = inlined_call_operand.hbm [shape: f32[2,16,128], index: 5, kind: output, shape index: {}]
  %s6 = sld [smem:[#allocation0]]
  $region69: #{tpu_custom_call.1} parent=0
    _
  %s8 = ssub.s32 1, %s6
  %s9 = scalar_select 0, %s8, %s6
  $region1: #{tpu_custom_call.1} parent=0
    #allocation2 [shape = 'u8[8192]{0}', space=vmem, size = 0x2000, scoped, tag = 'input window, operand 0']
    #allocation3 [shape = 's32[2]{0}', space=sflag, size = 0x8, scoped, tag = 'scoped memory for tpu_custom_call.1']
    #allocation4 [shape = 's32[2]{0}', space=sflag, size = 0x8, scoped, tag = 'scoped memory for tpu_custom_call.1']
    #allocation5 [shape = 'u8[98304]{0}', space=vmem, size = 0x18000, scoped, tag = 'input window, operand 1, single buffered']
    #allocation6 [shape = 's32[1]{0}', space=sflag, size = 0x4, scoped, tag = 'scoped memory for tpu_custom_call.1']
    #allocation7 [shape = 'u8[1536]{0}', space=vmem, size = 0x800, scoped, tag = 'input window, operand 2, single buffered']
    #allocation8 [shape = 'u8[32768]{0}', space=vmem, size = 0x8000, scoped, tag = 'input window, operand 3, single buffered']
    #allocation9 [shape = 's32[1]{0}', space=sflag, size = 0x4, scoped, tag = 'scoped memory for tpu_custom_call.1']
    #allocation10 [shape = 'u8[16384]{0}', space=vmem, size = 0x4000, scoped, tag = 'output window, operand 0']
    %10 = vsyncpa [#allocation3], 0
    %s11 = scalar_lea.sflag [#allocation3], 1
    %12 = vsyncpa %s11, 0
    %13 = vsyncpa [#allocation6], 0
    %14 = vsyncpa [#allocation9], 0
    %15 = vsyncpa [#allocation4], 0
    %s16 = scalar_lea.sflag [#allocation4], 1
    %17 = vsyncpa %s16, 0
    loop: start=0, step=1, limit=4
    $region2: #{tpu_custom_call.1} parent=1 // loop_pre_header
      _
    $region3: #{tpu_custom_call.1} parent=1 // loop_header
      %s19 = sphi 0, %s23
      %p20 = scmp.ge.s32.totalorder %s19, 4
      %s29 = sphi 0, %s31
      %s32 = sphi 0, %s29
      %s33 = sphi 0, %s32
      %s49 = sphi 0, %s33
      %s53 = sphi 0, %s53
      %s55 = sphi 0, %s53
      %s56 = sphi 0, %s55
      %s70 = sphi 0, %s56
      %s74 = sphi 0, %s74
      %s76 = sphi 0, %s74
      %s77 = sphi 0, %s76
      %s91 = sphi 0, %s77
      %s95 = sphi 0, %s95
      %s97 = sphi 0, %s95
      %s98 = sphi 0, %s97
      %s112 = sphi 0, %s98
      %s116 = sphi 0, %s116
      %s118 = sphi 0, %s116
      %s119 = sphi 0, %s118
      %s133 = sphi 0, %s119
      %s139 = sphi 0, %s141
      %s142 = sphi 0, %s139
      %s143 = sphi 0, %s142
      %s159 = sphi 0, %s143
    $region4: #{tpu_custom_call.1} parent=1 // loop_header_branch
      %22 = sbr.rel (%p20) target = $region8
    $region5: #{tpu_custom_call.1} parent=1 // loop_body
      %s24 = ssub.s32 %s19, 1
      %s25 = ssub.s32 %s19, 2
      %s26 = sadd.s32 %s19, 1
      %s27 = ssub.s32 %s19, %s26
      %p28 = scmp.eq.s32.totalorder %s27, 0
      %s30 = sadd.s32 %s29, 1
      %s31 = scalar_select %p28, %s29, %s30
      %p34 = pneg %p28
      %p35 = scmp.eq.s32.totalorder %s19, 1
      %p36 = por %p34, %p35
      %p37 = scmp.ne.s32.totalorder %s29, %s32
      %p38 = scmp.eq.s32.totalorder %s19, 0
      %p39 = por %p37, %p38
      %p40 = scmp.ne.s32.totalorder %s29, %s32
      %p41 = scmp.eq.s32.totalorder %s24, 1
      %p42 = por %p40, %p41
      %p43 = scmp.ne.s32.totalorder %s32, %s33
      %p44 = scmp.eq.s32.totalorder %s24, 0
      %p45 = por %p43, %p44
      %p46 = scmp.ne.s32.totalorder %s32, %s33
      %p47 = scmp.eq.s32.totalorder %s25, 1
      %p48 = por %p46, %p47
      %p50 = scmp.ne.s32.totalorder %s33, %s49
      %p51 = scmp.eq.s32.totalorder %s25, 0
      %p52 = por %p50, %p51
      %s54 = sadd.s32 %s53, 1
      %p57 = scmp.eq.s32.totalorder %s19, 1
      %p58 = scmp.ne.s32.totalorder %s53, %s55
      %p59 = scmp.eq.s32.totalorder %s19, 0
      %p60 = por %p58, %p59
      %p61 = scmp.ne.s32.totalorder %s53, %s55
      %p62 = scmp.eq.s32.totalorder %s24, 1
      %p63 = por %p61, %p62
      %p64 = scmp.ne.s32.totalorder %s55, %s56
      %p65 = scmp.eq.s32.totalorder %s24, 0
      %p66 = por %p64, %p65
      %p67 = scmp.ne.s32.totalorder %s55, %s56
      %p68 = scmp.eq.s32.totalorder %s25, 1
      %p69 = por %p67, %p68
      %p71 = scmp.ne.s32.totalorder %s56, %s70
      %p72 = scmp.eq.s32.totalorder %s25, 0
      %p73 = por %p71, %p72
      %s75 = sadd.s32 %s74, 1
      %p78 = scmp.eq.s32.totalorder %s19, 1
      %p79 = scmp.ne.s32.totalorder %s74, %s76
      %p80 = scmp.eq.s32.totalorder %s19, 0
      %p81 = por %p79, %p80
      %p82 = scmp.ne.s32.totalorder %s74, %s76
      %p83 = scmp.eq.s32.totalorder %s24, 1
      %p84 = por %p82, %p83
      %p85 = scmp.ne.s32.totalorder %s76, %s77
      %p86 = scmp.eq.s32.totalorder %s24, 0
      %p87 = por %p85, %p86
      %p88 = scmp.ne.s32.totalorder %s76, %s77
      %p89 = scmp.eq.s32.totalorder %s25, 1
      %p90 = por %p88, %p89
      %p92 = scmp.ne.s32.totalorder %s77, %s91
      %p93 = scmp.eq.s32.totalorder %s25, 0
      %p94 = por %p92, %p93
      %s96 = sadd.s32 %s95, 1
      %p99 = scmp.eq.s32.totalorder %s19, 1
      %p100 = scmp.ne.s32.totalorder %s95, %s97
      %p101 = scmp.eq.s32.totalorder %s19, 0
      %p102 = por %p100, %p101
      %p103 = scmp.ne.s32.totalorder %s95, %s97
      %p104 = scmp.eq.s32.totalorder %s24, 1
      %p105 = por %p103, %p104
      %p106 = scmp.ne.s32.totalorder %s97, %s98
      %p107 = scmp.eq.s32.totalorder %s24, 0
      %p108 = por %p106, %p107
      %p109 = scmp.ne.s32.totalorder %s97, %s98
      %p110 = scmp.eq.s32.totalorder %s25, 1
      %p111 = por %p109, %p110
      %p113 = scmp.ne.s32.totalorder %s98, %s112
      %p114 = scmp.eq.s32.totalorder %s25, 0
      %p115 = por %p113, %p114
      %s117 = sadd.s32 %s116, 1
      %p120 = scmp.eq.s32.totalorder %s19, 1
      %p121 = scmp.ne.s32.totalorder %s116, %s118
      %p122 = scmp.eq.s32.totalorder %s19, 0
      %p123 = por %p121, %p122
      %p124 = scmp.ne.s32.totalorder %s116, %s118
      %p125 = scmp.eq.s32.totalorder %s24, 1
      %p126 = por %p124, %p125
      %p127 = scmp.ne.s32.totalorder %s118, %s119
      %p128 = scmp.eq.s32.totalorder %s24, 0
      %p129 = por %p127, %p128
      %p130 = scmp.ne.s32.totalorder %s118, %s119
      %p131 = scmp.eq.s32.totalorder %s25, 1
      %p132 = por %p130, %p131
      %p134 = scmp.ne.s32.totalorder %s119, %s133
      %p135 = scmp.eq.s32.totalorder %s25, 0
      %p136 = por %p134, %p135
      %s137 = ssub.s32 %s19, %s26
      %p138 = scmp.eq.s32.totalorder %s137, 0
      %s140 = sadd.s32 %s139, 1
      %s141 = scalar_select %p138, %s139, %s140
      %p144 = pneg %p138
      %p145 = scmp.eq.s32.totalorder %s19, 1
      %p146 = por %p144, %p145
      %p147 = scmp.ne.s32.totalorder %s139, %s142
      %p148 = scmp.eq.s32.totalorder %s19, 0
      %p149 = por %p147, %p148
      %p150 = scmp.ne.s32.totalorder %s139, %s142
      %p151 = scmp.eq.s32.totalorder %s24, 1
      %p152 = por %p150, %p151
      %p153 = scmp.ne.s32.totalorder %s142, %s143
      %p154 = scmp.eq.s32.totalorder %s24, 0
      %p155 = por %p153, %p154
      %p156 = scmp.ne.s32.totalorder %s142, %s143
      %p157 = scmp.eq.s32.totalorder %s25, 1
      %p158 = por %p156, %p157
      %p160 = scmp.ne.s32.totalorder %s143, %s159
      %p161 = scmp.eq.s32.totalorder %s25, 0
      %p162 = por %p160, %p161
      %p163 = scmp.le.s32.totalorder 1, %s19
      %p164 = scmp.lt.s32.totalorder %s19, 3
      %p165 = pnand %p163, %p164
      %p166 = pneg %p165
      // Predicated region
      $region9: #{tpu_custom_call.1} parent=5 // pred_check
        _
      $region10: #{tpu_custom_call.1} parent=5 // pred_check_branch
        %168 = sbr.rel (%p165) target = $region12
      $region11: #{tpu_custom_call.1} parent=5 // pred_region
        %s169 = ssub.s32 %s19, 1
        // Predicated region
        $region13: #{tpu_custom_call.1} parent=11 // pred_check
          %p170 = pneg %p66
        $region14: #{tpu_custom_call.1} parent=11 // pred_check_branch
          %172 = sbr.rel (%p170) target = $region16
        $region15: #{tpu_custom_call.1} parent=11 // pred_region
          %174 = vsyncadd [#allocation6], 0
          %s175 = sshll.u32 %s1, 4
          %s176 = int_to_ptr.hbm [resolvable:$true] %s175
          %s177 = sshll.u32 [#allocation5], 4
          %s178 = int_to_ptr.vmem [resolvable:$true] %s177
          %183 = dma.hbm_to_vmem [thread:$0]  %s176, 3072, %s178, [#allocation6], 192, 192, 12
        $region16: #{tpu_custom_call.1} parent=11 // pred_fallthru
          _
        // Predicated region
        $region17: #{tpu_custom_call.1} parent=11 // pred_check
          %p184 = pneg %p87
        $region18: #{tpu_custom_call.1} parent=11 // pred_check_branch
          %186 = sbr.rel (%p184) target = $region20
        $region19: #{tpu_custom_call.1} parent=11 // pred_region
          %188 = vsyncadd [#allocation6], 0
          %s190 = sshll.u32 %s2, 4
          %s191 = int_to_ptr.hbm [resolvable:$true] %s190
          %s192 = sshll.u32 [#allocation7], 4
          %s193 = int_to_ptr.vmem [resolvable:$true] %s192
          %195 = dma.hbm_to_vmem [thread:$0]  %s191, 48, %s193, [#allocation6]
        $region20: #{tpu_custom_call.1} parent=11 // pred_fallthru
          _
        // Predicated region
        $region21: #{tpu_custom_call.1} parent=11 // pred_check
          %p196 = pneg %p108
        $region22: #{tpu_custom_call.1} parent=11 // pred_check_branch
          %198 = sbr.rel (%p196) target = $region24
        $region23: #{tpu_custom_call.1} parent=11 // pred_region
          %200 = vsyncadd [#allocation9], 0
          %s201 = sshll.u32 %s3, 4
          %s202 = int_to_ptr.hbm [resolvable:$true] %s201
          %s203 = sshll.u32 [#allocation8], 4
          %s204 = int_to_ptr.vmem [resolvable:$true] %s203
          %209 = dma.hbm_to_vmem [thread:$0]  %s202, 1024, %s204, [#allocation9], 64, 64, 4
        $region24: #{tpu_custom_call.1} parent=11 // pred_fallthru
          _
        // Predicated region
        $region25: #{tpu_custom_call.1} parent=11 // pred_check
          %p210 = pneg %p129
        $region26: #{tpu_custom_call.1} parent=11 // pred_check_branch
          %212 = sbr.rel (%p210) target = $region28
        $region27: #{tpu_custom_call.1} parent=11 // pred_region
          _
        $region28: #{tpu_custom_call.1} parent=11 // pred_fallthru
          _
      $region12: #{tpu_custom_call.1} parent=5 // pred_fallthru
        _
      %p213 = scmp.lt.s32.totalorder %s19, 2
      // Predicated region
      $region29: #{tpu_custom_call.1} parent=5 // pred_check
        %p214 = pneg %p213
      $region30: #{tpu_custom_call.1} parent=5 // pred_check_branch
        %216 = sbr.rel (%p214) target = $region32
      $region31: #{tpu_custom_call.1} parent=5 // pred_region
        // Predicated region
        $region33: #{tpu_custom_call.1} parent=31 // pred_check
          %p217 = pneg %p39
        $region34: #{tpu_custom_call.1} parent=31 // pred_check_branch
          %219 = sbr.rel (%p217) target = $region36
        $region35: #{tpu_custom_call.1} parent=31 // pred_region
          %s220 = sand.u32 %s29, 1
          %s221 = scalar_lea.sflag [#allocation3], %s220
          %s222 = sand.u32 %s29, 1
          %s223 = smul.addr %s222, 8
          %s224 = scalar_lea.vmem [#allocation2], %s223
          %226 = vsyncadd %s221, 0
          %s227 = smul.addr %s19, 2
          %s228 = smul.addr %s227, 4
          %s229 = scalar_lea.hbm %s0, %s228
          %s230 = sshll.u32 %s229, 4
          %s231 = int_to_ptr.hbm [resolvable:$true] %s230
          %s232 = sshll.u32 %s224, 4
          %s233 = int_to_ptr.vmem [resolvable:$true] %s232
          %238 = dma.hbm_to_vmem [thread:$0]  %s231, 128, %s233, %s221, 64, 64, 4
        $region36: #{tpu_custom_call.1} parent=31 // pred_fallthru
          _
      $region32: #{tpu_custom_call.1} parent=5 // pred_fallthru
        _
      %p239 = scmp.le.s32.totalorder 1, %s19
      %p240 = scmp.lt.s32.totalorder %s19, 3
      %p241 = pnand %p239, %p240
      %p242 = pneg %p241
      // Predicated region
      $region37: #{tpu_custom_call.1} parent=5 // pred_check
        _
      $region38: #{tpu_custom_call.1} parent=5 // pred_check_branch
        %244 = sbr.rel (%p241) target = $region40
      $region39: #{tpu_custom_call.1} parent=5 // pred_region
        %s245 = ssub.s32 %s19, 1
        %s246 = sand.u32 %s32, 1
        %s247 = scalar_lea.sflag [#allocation3], %s246
        %s248 = sand.u32 %s32, 1
        %s249 = smul.addr %s248, 8
        %s250 = scalar_lea.vmem [#allocation2], %s249
        // Predicated region
        $region41: #{tpu_custom_call.1} parent=39 // pred_check
          %p251 = pneg %p45
        $region42: #{tpu_custom_call.1} parent=39 // pred_check_branch
          %253 = sbr.rel (%p251) target = $region44
        $region43: #{tpu_custom_call.1} parent=39 // pred_region
          %255 = dma.done %s247, 128
        $region44: #{tpu_custom_call.1} parent=39 // pred_fallthru
          _
        // Predicated region
        $region45: #{tpu_custom_call.1} parent=39 // pred_check
          %p256 = pneg %p66
        $region46: #{tpu_custom_call.1} parent=39 // pred_check_branch
          %258 = sbr.rel (%p256) target = $region48
        $region47: #{tpu_custom_call.1} parent=39 // pred_region
          %260 = dma.done [#allocation6], 3072
        $region48: #{tpu_custom_call.1} parent=39 // pred_fallthru
          _
        // Predicated region
        $region49: #{tpu_custom_call.1} parent=39 // pred_check
          %p261 = pneg %p87
        $region50: #{tpu_custom_call.1} parent=39 // pred_check_branch
          %263 = sbr.rel (%p261) target = $region52
        $region51: #{tpu_custom_call.1} parent=39 // pred_region
          %265 = dma.done [#allocation6], 48
        $region52: #{tpu_custom_call.1} parent=39 // pred_fallthru
          _
        // Predicated region
        $region53: #{tpu_custom_call.1} parent=39 // pred_check
          %p266 = pneg %p108
        $region54: #{tpu_custom_call.1} parent=39 // pred_check_branch
          %268 = sbr.rel (%p266) target = $region56
        $region55: #{tpu_custom_call.1} parent=39 // pred_region
          %270 = dma.done [#allocation9], 1024
        $region56: #{tpu_custom_call.1} parent=39 // pred_fallthru
          _
        %s271 = sand.u32 %s32, 1
        %s272 = scalar_lea.sflag [#allocation3], %s271
        %s273 = sand.u32 %s32, 1
        %s274 = smul.addr %s273, 8
        %s275 = scalar_lea.vmem [#allocation2], %s274
        %p276 = pneg %p45
        %p277 = pneg %p42
        %p278 = pneg %p66
        %p279 = pneg %p63
        %p280 = pneg %p87
        %p281 = pneg %p84
        %p282 = pneg %p108
        %p283 = pneg %p105
        %p284 = pneg %p129
        %p285 = pneg %p126
        %p286 = pneg %p155
        %p287 = pneg %p152
        %s288 = sand.u32 %s142, 1
        %s289 = scalar_lea.sflag [#allocation4], %s288
        %s290 = sand.u32 %s142, 1
        %s291 = smul.addr %s290, 16
        %s292 = scalar_lea.vmem [#allocation10], %s291
        %v294 = vld [vmem:[%s250] sm:$0xf]
        %v295 = vld [vmem:[%s250 + $0x4] sm:$0xf]
        %v296 = vld [vmem:[#allocation5] sm:$0xff]
        %v297 = vld [vmem:[#allocation5 + $0x8] sm:$0xf]
        %v298 = vld [vmem:[#allocation5 + $0xc] sm:$0xff]
        %v299 = vld [vmem:[#allocation5 + $0x14] sm:$0xf]
        %v300 = vld [vmem:[#allocation5 + $0x18] sm:$0xff]
        %v301 = vld [vmem:[#allocation5 + $0x20] sm:$0xf]
        %v302 = vld [vmem:[#allocation5 + $0x24] sm:$0xff]
        %v303 = vld [vmem:[#allocation5 + $0x2c] sm:$0xf]
        %v304 = vld [vmem:[#allocation5 + $0x30] sm:$0xff]
        %v305 = vld [vmem:[#allocation5 + $0x38] sm:$0xf]
        %v306 = vld [vmem:[#allocation5 + $0x3c] sm:$0xff]
        %v307 = vld [vmem:[#allocation5 + $0x44] sm:$0xf]
        %v308 = vld [vmem:[#allocation5 + $0x48] sm:$0xff]
        %v309 = vld [vmem:[#allocation5 + $0x50] sm:$0xf]
        %v310 = vld [vmem:[#allocation5 + $0x54] sm:$0xff]
        %v311 = vld [vmem:[#allocation5 + $0x5c] sm:$0xf]
        %v312 = vld [vmem:[#allocation5 + $0x60] sm:$0xff]
        %v313 = vld [vmem:[#allocation5 + $0x68] sm:$0xf]
        %v314 = vld [vmem:[#allocation5 + $0x6c] sm:$0xff]
        %v315 = vld [vmem:[#allocation5 + $0x74] sm:$0xf]
        %v316 = vld [vmem:[#allocation5 + $0x78] sm:$0xff]
        %v317 = vld [vmem:[#allocation5 + $0x80] sm:$0xf]
        %v318 = vld [vmem:[#allocation5 + $0x84] sm:$0xff]
        %v319 = vld [vmem:[#allocation5 + $0x8c] sm:$0xf]
        %v320 = vld [vmem:[#allocation5 + $0x90] sm:$0xff]
        %v321 = vld [vmem:[#allocation5 + $0x98] sm:$0xf]
        %v322 = vld [vmem:[#allocation5 + $0x9c] sm:$0xff]
        %v323 = vld [vmem:[#allocation5 + $0xa4] sm:$0xf]
        %v324 = vld [vmem:[#allocation5 + $0xa8] sm:$0xff]
        %v325 = vld [vmem:[#allocation5 + $0xb0] sm:$0xf]
        %v326 = vld [vmem:[#allocation5 + $0xb4] sm:$0xff]
        %v327 = vld [vmem:[#allocation5 + $0xbc] sm:$0xf]
        %v328 = vld [vmem:[#allocation7] sm:$0x7]
        %v330 = vperm.slane %v328, 0
        %v331 = vperm.slane %v328, 1
        %v332 = vperm.slane %v328, 2
        %v338 = vunpack.c.l.b16 %v294
        %v339 = vunpack.c.l.b16 %v295
        %v340 = vpack.c.b16 %v339, %v338
        %v374 = vunpack.c.l.b16 %v296
        %v375 = vunpack.c.h.b16 %v296
        %v376 = vunpack.c.l.b16 %v297
        %v377 = vunpack.c.l.b16 %v298
        %v378 = vunpack.c.h.b16 %v298
        %v379 = vunpack.c.l.b16 %v299
        %v380 = vunpack.c.l.b16 %v300
        %v381 = vunpack.c.h.b16 %v300
        %v382 = vunpack.c.l.b16 %v301
        %v383 = vunpack.c.l.b16 %v302
        %v384 = vunpack.c.h.b16 %v302
        %v385 = vunpack.c.l.b16 %v303
        %v386 = vunpack.c.l.b16 %v304
        %v387 = vunpack.c.h.b16 %v304
        %v388 = vunpack.c.l.b16 %v305
        %v389 = vunpack.c.l.b16 %v306
        %v390 = vunpack.c.h.b16 %v306
        %v391 = vunpack.c.l.b16 %v307
        %v392 = vunpack.c.l.b16 %v308
        %v393 = vunpack.c.h.b16 %v308
        %v394 = vunpack.c.l.b16 %v309
        %v395 = vunpack.c.l.b16 %v310
        %v396 = vunpack.c.h.b16 %v310
        %v397 = vunpack.c.l.b16 %v311
        %v398 = vunpack.c.l.b16 %v312
        %v399 = vunpack.c.h.b16 %v312
        %v400 = vunpack.c.l.b16 %v313
        %v401 = vunpack.c.l.b16 %v314
        %v402 = vunpack.c.h.b16 %v314
        %v403 = vunpack.c.l.b16 %v315
        %v404 = vunpack.c.l.b16 %v316
        %v405 = vunpack.c.h.b16 %v316
        %v406 = vunpack.c.l.b16 %v317
        %v407 = vunpack.c.l.b16 %v318
        %v408 = vunpack.c.h.b16 %v318
        %v409 = vunpack.c.l.b16 %v319
        %v410 = vunpack.c.l.b16 %v320
        %v411 = vunpack.c.h.b16 %v320
        %v412 = vunpack.c.l.b16 %v321
        %v413 = vunpack.c.l.b16 %v322
        %v414 = vunpack.c.h.b16 %v322
        %v415 = vunpack.c.l.b16 %v323
        %v416 = vunpack.c.l.b16 %v324
        %v417 = vunpack.c.h.b16 %v324
        %v418 = vunpack.c.l.b16 %v325
        %v419 = vunpack.c.l.b16 %v326
        %v420 = vunpack.c.h.b16 %v326
        %v421 = vunpack.c.l.b16 %v327
        %v422 = vpack.c.b16 %v377, %v374
        %v423 = vpack.c.b16 %v378, %v375
        %v424 = vpack.c.b16 %v379, %v376
        %v425 = vpack.c.b16 %v383, %v380
        %v426 = vpack.c.b16 %v384, %v381
        %v427 = vpack.c.b16 %v385, %v382
        %v428 = vpack.c.b16 %v389, %v386
        %v429 = vpack.c.b16 %v390, %v387
        %v430 = vpack.c.b16 %v391, %v388
        %v431 = vpack.c.b16 %v395, %v392
        %v432 = vpack.c.b16 %v396, %v393
        %v433 = vpack.c.b16 %v397, %v394
        %v434 = vpack.c.b16 %v401, %v398
        %v435 = vpack.c.b16 %v402, %v399
        %v436 = vpack.c.b16 %v403, %v400
        %v437 = vpack.c.b16 %v407, %v404
        %v438 = vpack.c.b16 %v408, %v405
        %v439 = vpack.c.b16 %v409, %v406
        %v440 = vpack.c.b16 %v413, %v410
        %v441 = vpack.c.b16 %v414, %v411
        %v442 = vpack.c.b16 %v415, %v412
        %v443 = vpack.c.b16 %v419, %v416
        %v444 = vpack.c.b16 %v420, %v417
        %v445 = vpack.c.b16 %v421, %v418
        %470 = vmatpush.bf16.msra.mxu0 %v443
        %471 = vmatpush.bf16.msra.mxu0 %v440
        %472 = vmatpush.bf16.msra.mxu0 %v437
        %473 = vmatpush.bf16.msra.mxu0 %v434
        %474 = vmatpush.bf16.msra.mxu0 %v431
        %475 = vmatpush.bf16.msra.mxu0 %v428
        %476 = vmatpush.bf16.msra.mxu0 %v425
        %477 = vmatpush.bf16.msra.mxu0 %v422
        %478 = vmatmul.bf16.gmra.mxu0 %v340
        %v479 = vpop.f32.mrf.mxu0
        %v480 = vadd.f32 %v330, %v479
        %v481 = vpop.f32.mrf.mxu0
        %v482 = vadd.f32 %v330, %v481
        %483 = vdwg.mxu0
        %484 = vmatpush.bf16.msra.mxu0 %v444
        %485 = vmatpush.bf16.msra.mxu0 %v441
        %486 = vmatpush.bf16.msra.mxu0 %v438
        %487 = vmatpush.bf16.msra.mxu0 %v435
        %488 = vmatpush.bf16.msra.mxu0 %v432
        %489 = vmatpush.bf16.msra.mxu0 %v429
        %490 = vmatpush.bf16.msra.mxu0 %v426
        %491 = vmatpush.bf16.msra.mxu0 %v423
        %492 = vmatmul.bf16.gmra.mxu0 %v340
        %v493 = vpop.f32.mrf.mxu0
        %v494 = vadd.f32 %v331, %v493
        %v495 = vpop.f32.mrf.mxu0
        %v496 = vadd.f32 %v331, %v495
        %497 = vdwg.mxu0
        %498 = vmatpush.bf16.msra.mxu0 %v445
        %499 = vmatpush.bf16.msra.mxu0 %v442
        %500 = vmatpush.bf16.msra.mxu0 %v439
        %501 = vmatpush.bf16.msra.mxu0 %v436
        %502 = vmatpush.bf16.msra.mxu0 %v433
        %503 = vmatpush.bf16.msra.mxu0 %v430
        %504 = vmatpush.bf16.msra.mxu0 %v427
        %505 = vmatpush.bf16.msra.mxu0 %v424
        %506 = vmatmul.bf16.gmra.mxu0 %v340
        %v507 = vpop.f32.mrf.mxu0
        %v508 = vadd.f32 %v332, %v507
        %v509 = vpop.f32.mrf.mxu0
        %v510 = vadd.f32 %v332, %v509
        %511 = vdwg.mxu0
        %v512 = vpack.c.bf16 %v494, %v480
        %v513 = vpack.c.bf16 %v508, %v508
        %v514 = vpack.c.bf16 %v496, %v482
        %v515 = vpack.c.bf16 %v510, %v510
        %518 = vrot.lane.b32.xlu0 %v512, 96
        %v519 = vpop.permute.xlu0 %518
        %520 = vrot.lane.b32.xlu0 %v514, 96
        %v521 = vpop.permute.xlu0 %520
        %522 = vrot.lane.b32.xlu0 %v512, 64
        %v523 = vpop.permute.xlu0 %522
        %524 = vrot.lane.b32.xlu0 %v514, 64
        %v525 = vpop.permute.xlu0 %524
        %526 = vrot.lane.b32.xlu0 %v512, 32
        %v527 = vpop.permute.xlu0 %526
        %528 = vrot.lane.b32.xlu0 %v514, 32
        %v529 = vpop.permute.xlu0 %528
        %v532 = vpack.i.b16 %v519, %v512
        %v533 = vshrl.u32 %v512, 16
        %v534 = vshrl.u32 %v519, 16
        %v535 = vpack.i.b16 %v534, %v533
        %v538 = vpack.i.b16 %v527, %v523
        %v539 = vshrl.u32 %v523, 16
        %v540 = vshrl.u32 %v527, 16
        %v541 = vpack.i.b16 %v540, %v539
        %v544 = vpack.i.b16 %v521, %v514
        %v545 = vshrl.u32 %v514, 16
        %v546 = vshrl.u32 %v521, 16
        %v547 = vpack.i.b16 %v546, %v545
        %v550 = vpack.i.b16 %v529, %v525
        %v551 = vshrl.u32 %v525, 16
        %v552 = vshrl.u32 %v529, 16
        %v553 = vpack.i.b16 %v552, %v551
        %v556 = vunpack.c.l.s4 1983009808
        %v557 = vunpack.c.0.s8 %v556
        %v558 = vperm.slane %v532, %v557
        %v561 = vunpack.c.l.s4 1983009808
        %v562 = vunpack.c.0.s8 %v561
        %v563 = vperm.slane %v538, %v562
        %v564 = vrot.slane %v563, 4
        %vm565 = vcmask 1047556
        %v566 = vsel %vm565, %v564, %v558
        %v567 = vrot.slane %v558, 4
        %v568 = vsel %vm565, %v563, %v567
        %v570 = vunpack.c.l.s4 1934713408
        %v571 = vunpack.c.0.s8 %v570
        %v572 = vperm.slane %v566, %v571
        %v574 = vunpack.c.l.s4 1934713408
        %v575 = vunpack.c.0.s8 %v574
        %v576 = vperm.slane %v568, %v575
        %v577 = vrot.slane %v572, 4
        %v578 = vsel %vm565, 0, %v577
        %v579 = vrot.slane %v576, 4
        %v580 = vsel %vm565, 0, %v579
        %v583 = vunpack.c.l.s4 1983009808
        %v584 = vunpack.c.0.s8 %v583
        %v585 = vperm.slane %v535, %v584
        %v588 = vunpack.c.l.s4 1983009808
        %v589 = vunpack.c.0.s8 %v588
        %v590 = vperm.slane %v541, %v589
        %v591 = vrot.slane %v590, 4
        %v592 = vsel %vm565, %v591, %v585
        %v593 = vrot.slane %v585, 4
        %v594 = vsel %vm565, %v590, %v593
        %v596 = vunpack.c.l.s4 1934713408
        %v597 = vunpack.c.0.s8 %v596
        %v598 = vperm.slane %v592, %v597
        %v600 = vunpack.c.l.s4 1934713408
        %v601 = vunpack.c.0.s8 %v600
        %v602 = vperm.slane %v594, %v601
        %v603 = vrot.slane %v598, 4
        %v604 = vsel %vm565, 0, %v603
        %v605 = vrot.slane %v602, 4
        %v606 = vsel %vm565, 0, %v605
        %v609 = vunpack.c.l.s4 1983009808
        %v610 = vunpack.c.0.s8 %v609
        %v611 = vperm.slane %v544, %v610
        %v614 = vunpack.c.l.s4 1983009808
        %v615 = vunpack.c.0.s8 %v614
        %v616 = vperm.slane %v550, %v615
        %v617 = vrot.slane %v616, 4
        %v618 = vsel %vm565, %v617, %v611
        %v619 = vrot.slane %v611, 4
        %v620 = vsel %vm565, %v616, %v619
        %v622 = vunpack.c.l.s4 1934713408
        %v623 = vunpack.c.0.s8 %v622
        %v624 = vperm.slane %v618, %v623
        %v626 = vunpack.c.l.s4 1934713408
        %v627 = vunpack.c.0.s8 %v626
        %v628 = vperm.slane %v620, %v627
        %v629 = vrot.slane %v624, 4
        %v630 = vsel %vm565, 0, %v629
        %v631 = vrot.slane %v628, 4
        %v632 = vsel %vm565, 0, %v631
        %v635 = vunpack.c.l.s4 1983009808
        %v636 = vunpack.c.0.s8 %v635
        %v637 = vperm.slane %v547, %v636
        %v640 = vunpack.c.l.s4 1983009808
        %v641 = vunpack.c.0.s8 %v640
        %v642 = vperm.slane %v553, %v641
        %v643 = vrot.slane %v642, 4
        %v644 = vsel %vm565, %v643, %v637
        %v645 = vrot.slane %v637, 4
        %v646 = vsel %vm565, %v642, %v645
        %v648 = vunpack.c.l.s4 1934713408
        %v649 = vunpack.c.0.s8 %v648
        %v650 = vperm.slane %v644, %v649
        %v652 = vunpack.c.l.s4 1934713408
        %v653 = vunpack.c.0.s8 %v652
        %v654 = vperm.slane %v646, %v653
        %v655 = vrot.slane %v650, 4
        %v656 = vsel %vm565, 0, %v655
        %v657 = vrot.slane %v654, 4
        %v658 = vsel %vm565, 0, %v657
        %v659 = vsel %vm565, %v579, %v572
        %v661 = vunpack.c.l.s4 1983009808
        %v662 = vunpack.c.0.s8 %v661
        %v663 = vperm.slane %v659, %v662
        %v664 = vrot.slane %v580, 4
        %v665 = vsel %vm565, %v664, %v578
        %v667 = vunpack.c.l.s4 1983009808
        %v668 = vunpack.c.0.s8 %v667
        %v669 = vperm.slane %v665, %v668
        %v670 = vrot.slane %v669, 4
        %v671 = vsel %vm565, %v670, %v663
        %v673 = vunpack.c.l.s4 1934713408
        %v674 = vunpack.c.0.s8 %v673
        %v675 = vperm.slane %v671, %v674
        %v676 = vrot.slane %v675, 4
        %v677 = vsel %vm565, 0, %v676
        %v678 = vsel %vm565, %v605, %v598
        %v680 = vunpack.c.l.s4 1983009808
        %v681 = vunpack.c.0.s8 %v680
        %v682 = vperm.slane %v678, %v681
        %v683 = vrot.slane %v606, 4
        %v684 = vsel %vm565, %v683, %v604
        %v686 = vunpack.c.l.s4 1983009808
        %v687 = vunpack.c.0.s8 %v686
        %v688 = vperm.slane %v684, %v687
        %v689 = vrot.slane %v688, 4
        %v690 = vsel %vm565, %v689, %v682
        %v692 = vunpack.c.l.s4 1934713408
        %v693 = vunpack.c.0.s8 %v692
        %v694 = vperm.slane %v690, %v693
        %v695 = vrot.slane %v694, 4
        %v696 = vsel %vm565, 0, %v695
        %v697 = vsel %vm565, %v631, %v624
        %v699 = vunpack.c.l.s4 1983009808
        %v700 = vunpack.c.0.s8 %v699
        %v701 = vperm.slane %v697, %v700
        %v702 = vrot.slane %v632, 4
        %v703 = vsel %vm565, %v702, %v630
        %v705 = vunpack.c.l.s4 1983009808
        %v706 = vunpack.c.0.s8 %v705
        %v707 = vperm.slane %v703, %v706
        %v708 = vrot.slane %v707, 4
        %v709 = vsel %vm565, %v708, %v701
        %v711 = vunpack.c.l.s4 1934713408
        %v712 = vunpack.c.0.s8 %v711
        %v713 = vperm.slane %v709, %v712
        %v714 = vrot.slane %v713, 4
        %v715 = vsel %vm565, 0, %v714
        %v716 = vsel %vm565, %v657, %v650
        %v718 = vunpack.c.l.s4 1983009808
        %v719 = vunpack.c.0.s8 %v718
        %v720 = vperm.slane %v716, %v719
        %v721 = vrot.slane %v658, 4
        %v722 = vsel %vm565, %v721, %v656
        %v724 = vunpack.c.l.s4 1983009808
        %v725 = vunpack.c.0.s8 %v724
        %v726 = vperm.slane %v722, %v725
        %v727 = vrot.slane %v726, 4
        %v728 = vsel %vm565, %v727, %v720
        %v730 = vunpack.c.l.s4 1934713408
        %v731 = vunpack.c.0.s8 %v730
        %v732 = vperm.slane %v728, %v731
        %v733 = vrot.slane %v732, 4
        %v734 = vsel %vm565, 0, %v733
        %v737 = vpack.i.b16 %v694, %v675
        %v738 = vshrl.u32 %v675, 16
        %v739 = vshrl.u32 %v694, 16
        %v740 = vpack.i.b16 %v739, %v738
        %v743 = vpack.i.b16 %v696, %v677
        %v744 = vshrl.u32 %v677, 16
        %v745 = vshrl.u32 %v696, 16
        %v746 = vpack.i.b16 %v745, %v744
        %v749 = vpack.i.b16 %v732, %v713
        %v750 = vshrl.u32 %v713, 16
        %v751 = vshrl.u32 %v732, 16
        %v752 = vpack.i.b16 %v751, %v750
        %v755 = vpack.i.b16 %v734, %v715
        %v756 = vshrl.u32 %v715, 16
        %v757 = vshrl.u32 %v734, 16
        %v758 = vpack.i.b16 %v757, %v756
        %v759 = vrot.slane %v512, 4
        %v760 = vrot.slane %v514, 4
        %v761 = vrot.slane %v519, 4
        %v762 = vrot.slane %v521, 4
        %v763 = vrot.slane %v523, 4
        %v764 = vrot.slane %v525, 4
        %v765 = vrot.slane %v527, 4
        %v766 = vrot.slane %v529, 4
        %v769 = vpack.i.b16 %v761, %v759
        %v770 = vshrl.u32 %v759, 16
        %v771 = vshrl.u32 %v761, 16
        %v772 = vpack.i.b16 %v771, %v770
        %v775 = vpack.i.b16 %v765, %v763
        %v776 = vshrl.u32 %v763, 16
        %v777 = vshrl.u32 %v765, 16
        %v778 = vpack.i.b16 %v777, %v776
        %v781 = vpack.i.b16 %v762, %v760
        %v782 = vshrl.u32 %v760, 16
        %v783 = vshrl.u32 %v762, 16
        %v784 = vpack.i.b16 %v783, %v782
        %v787 = vpack.i.b16 %v766, %v764
        %v788 = vshrl.u32 %v764, 16
        %v789 = vshrl.u32 %v766, 16
        %v790 = vpack.i.b16 %v789, %v788
        %v793 = vunpack.c.l.s4 1983009808
        %v794 = vunpack.c.0.s8 %v793
        %v795 = vperm.slane %v769, %v794
        %v798 = vunpack.c.l.s4 1983009808
        %v799 = vunpack.c.0.s8 %v798
        %v800 = vperm.slane %v775, %v799
        %v801 = vrot.slane %v800, 4
        %v802 = vsel %vm565, %v801, %v795
        %v803 = vrot.slane %v795, 4
        %v804 = vsel %vm565, %v800, %v803
        %v806 = vunpack.c.l.s4 1934713408
        %v807 = vunpack.c.0.s8 %v806
        %v808 = vperm.slane %v802, %v807
        %v810 = vunpack.c.l.s4 1934713408
        %v811 = vunpack.c.0.s8 %v810
        %v812 = vperm.slane %v804, %v811
        %v813 = vrot.slane %v808, 4
        %v814 = vsel %vm565, 0, %v813
        %v815 = vrot.slane %v812, 4
        %v816 = vsel %vm565, 0, %v815
        %v819 = vunpack.c.l.s4 1983009808
        %v820 = vunpack.c.0.s8 %v819
        %v821 = vperm.slane %v772, %v820
        %v824 = vunpack.c.l.s4 1983009808
        %v825 = vunpack.c.0.s8 %v824
        %v826 = vperm.slane %v778, %v825
        %v827 = vrot.slane %v826, 4
        %v828 = vsel %vm565, %v827, %v821
        %v829 = vrot.slane %v821, 4
        %v830 = vsel %vm565, %v826, %v829
        %v832 = vunpack.c.l.s4 1934713408
        %v833 = vunpack.c.0.s8 %v832
        %v834 = vperm.slane %v828, %v833
        %v836 = vunpack.c.l.s4 1934713408
        %v837 = vunpack.c.0.s8 %v836
        %v838 = vperm.slane %v830, %v837
        %v839 = vrot.slane %v834, 4
        %v840 = vsel %vm565, 0, %v839
        %v841 = vrot.slane %v838, 4
        %v842 = vsel %vm565, 0, %v841
        %v845 = vunpack.c.l.s4 1983009808
        %v846 = vunpack.c.0.s8 %v845
        %v847 = vperm.slane %v781, %v846
        %v850 = vunpack.c.l.s4 1983009808
        %v851 = vunpack.c.0.s8 %v850
        %v852 = vperm.slane %v787, %v851
        %v853 = vrot.slane %v852, 4
        %v854 = vsel %vm565, %v853, %v847
        %v855 = vrot.slane %v847, 4
        %v856 = vsel %vm565, %v852, %v855
        %v858 = vunpack.c.l.s4 1934713408
        %v859 = vunpack.c.0.s8 %v858
        %v860 = vperm.slane %v854, %v859
        %v862 = vunpack.c.l.s4 1934713408
        %v863 = vunpack.c.0.s8 %v862
        %v864 = vperm.slane %v856, %v863
        %v865 = vrot.slane %v860, 4
        %v866 = vsel %vm565, 0, %v865
        %v867 = vrot.slane %v864, 4
        %v868 = vsel %vm565, 0, %v867
        %v871 = vunpack.c.l.s4 1983009808
        %v872 = vunpack.c.0.s8 %v871
        %v873 = vperm.slane %v784, %v872
        %v876 = vunpack.c.l.s4 1983009808
        %v877 = vunpack.c.0.s8 %v876
        %v878 = vperm.slane %v790, %v877
        %v879 = vrot.slane %v878, 4
        %v880 = vsel %vm565, %v879, %v873
        %v881 = vrot.slane %v873, 4
        %v882 = vsel %vm565, %v878, %v881
        %v884 = vunpack.c.l.s4 1934713408
        %v885 = vunpack.c.0.s8 %v884
        %v886 = vperm.slane %v880, %v885
        %v888 = vunpack.c.l.s4 1934713408
        %v889 = vunpack.c.0.s8 %v888
        %v890 = vperm.slane %v882, %v889
        %v891 = vrot.slane %v886, 4
        %v892 = vsel %vm565, 0, %v891
        %v893 = vrot.slane %v890, 4
        %v894 = vsel %vm565, 0, %v893
        %v895 = vsel %vm565, %v815, %v808
        %v897 = vunpack.c.l.s4 1983009808
        %v898 = vunpack.c.0.s8 %v897
        %v899 = vperm.slane %v895, %v898
        %v900 = vrot.slane %v816, 4
        %v901 = vsel %vm565, %v900, %v814
        %v903 = vunpack.c.l.s4 1983009808
        %v904 = vunpack.c.0.s8 %v903
        %v905 = vperm.slane %v901, %v904
        %v906 = vrot.slane %v905, 4
        %v907 = vsel %vm565, %v906, %v899
        %v909 = vunpack.c.l.s4 1934713408
        %v910 = vunpack.c.0.s8 %v909
        %v911 = vperm.slane %v907, %v910
        %v912 = vrot.slane %v911, 4
        %v913 = vsel %vm565, 0, %v912
        %v914 = vsel %vm565, %v841, %v834
        %v916 = vunpack.c.l.s4 1983009808
        %v917 = vunpack.c.0.s8 %v916
        %v918 = vperm.slane %v914, %v917
        %v919 = vrot.slane %v842, 4
        %v920 = vsel %vm565, %v919, %v840
        %v922 = vunpack.c.l.s4 1983009808
        %v923 = vunpack.c.0.s8 %v922
        %v924 = vperm.slane %v920, %v923
        %v925 = vrot.slane %v924, 4
        %v926 = vsel %vm565, %v925, %v918
        %v928 = vunpack.c.l.s4 1934713408
        %v929 = vunpack.c.0.s8 %v928
        %v930 = vperm.slane %v926, %v929
        %v931 = vrot.slane %v930, 4
        %v932 = vsel %vm565, 0, %v931
        %v933 = vsel %vm565, %v867, %v860
        %v935 = vunpack.c.l.s4 1983009808
        %v936 = vunpack.c.0.s8 %v935
        %v937 = vperm.slane %v933, %v936
        %v938 = vrot.slane %v868, 4
        %v939 = vsel %vm565, %v938, %v866
        %v941 = vunpack.c.l.s4 1983009808
        %v942 = vunpack.c.0.s8 %v941
        %v943 = vperm.slane %v939, %v942
        %v944 = vrot.slane %v943, 4
        %v945 = vsel %vm565, %v944, %v937
        %v947 = vunpack.c.l.s4 1934713408
        %v948 = vunpack.c.0.s8 %v947
        %v949 = vperm.slane %v945, %v948
        %v950 = vrot.slane %v949, 4
        %v951 = vsel %vm565, 0, %v950
        %v952 = vsel %vm565, %v893, %v886
        %v954 = vunpack.c.l.s4 1983009808
        %v955 = vunpack.c.0.s8 %v954
        %v956 = vperm.slane %v952, %v955
        %v957 = vrot.slane %v894, 4
        %v958 = vsel %vm565, %v957, %v892
        %v960 = vunpack.c.l.s4 1983009808
        %v961 = vunpack.c.0.s8 %v960
        %v962 = vperm.slane %v958, %v961
        %v963 = vrot.slane %v962, 4
        %v964 = vsel %vm565, %v963, %v956
        %v966 = vunpack.c.l.s4 1934713408
        %v967 = vunpack.c.0.s8 %v966
        %v968 = vperm.slane %v964, %v967
        %v969 = vrot.slane %v968, 4
        %v970 = vsel %vm565, 0, %v969
        %v973 = vpack.i.b16 %v930, %v911
        %v974 = vshrl.u32 %v911, 16
        %v975 = vshrl.u32 %v930, 16
        %v976 = vpack.i.b16 %v975, %v974
        %v979 = vpack.i.b16 %v932, %v913
        %v980 = vshrl.u32 %v913, 16
        %v981 = vshrl.u32 %v932, 16
        %v982 = vpack.i.b16 %v981, %v980
        %v985 = vpack.i.b16 %v968, %v949
        %v986 = vshrl.u32 %v949, 16
        %v987 = vshrl.u32 %v968, 16
        %v988 = vpack.i.b16 %v987, %v986
        %v991 = vpack.i.b16 %v970, %v951
        %v992 = vshrl.u32 %v951, 16
        %v993 = vshrl.u32 %v970, 16
        %v994 = vpack.i.b16 %v993, %v992
        %997 = vrot.lane.b32.xlu0 %v513, 96
        %v998 = vpop.permute.xlu0 %997
        %999 = vrot.lane.b32.xlu0 %v515, 96
        %v1000 = vpop.permute.xlu0 %999
        %1001 = vrot.lane.b32.xlu0 %v513, 64
        %v1002 = vpop.permute.xlu0 %1001
        %1003 = vrot.lane.b32.xlu0 %v515, 64
        %v1004 = vpop.permute.xlu0 %1003
        %1005 = vrot.lane.b32.xlu0 %v513, 32
        %v1006 = vpop.permute.xlu0 %1005
        %1007 = vrot.lane.b32.xlu0 %v515, 32
        %v1008 = vpop.permute.xlu0 %1007
        %v1011 = vpack.i.b16 %v998, %v513
        %v1012 = vshrl.u32 %v513, 16
        %v1013 = vshrl.u32 %v998, 16
        %v1014 = vpack.i.b16 %v1013, %v1012
        %v1017 = vpack.i.b16 %v1006, %v1002
        %v1018 = vshrl.u32 %v1002, 16
        %v1019 = vshrl.u32 %v1006, 16
        %v1020 = vpack.i.b16 %v1019, %v1018
        %v1023 = vpack.i.b16 %v1000, %v515
        %v1024 = vshrl.u32 %v515, 16
        %v1025 = vshrl.u32 %v1000, 16
        %v1026 = vpack.i.b16 %v1025, %v1024
        %v1029 = vpack.i.b16 %v1008, %v1004
        %v1030 = vshrl.u32 %v1004, 16
        %v1031 = vshrl.u32 %v1008, 16
        %v1032 = vpack.i.b16 %v1031, %v1030
        %v1035 = vunpack.c.l.s4 1983009808
        %v1036 = vunpack.c.0.s8 %v1035
        %v1037 = vperm.slane %v1011, %v1036
        %v1040 = vunpack.c.l.s4 1983009808
        %v1041 = vunpack.c.0.s8 %v1040
        %v1042 = vperm.slane %v1017, %v1041
        %v1043 = vrot.slane %v1042, 4
        %v1044 = vsel %vm565, %v1043, %v1037
        %v1045 = vrot.slane %v1037, 4
        %v1046 = vsel %vm565, %v1042, %v1045
        %v1048 = vunpack.c.l.s4 1934713408
        %v1049 = vunpack.c.0.s8 %v1048
        %v1050 = vperm.slane %v1044, %v1049
        %v1052 = vunpack.c.l.s4 1934713408
        %v1053 = vunpack.c.0.s8 %v1052
        %v1054 = vperm.slane %v1046, %v1053
        %v1055 = vrot.slane %v1050, 4
        %v1056 = vsel %vm565, 0, %v1055
        %v1057 = vrot.slane %v1054, 4
        %v1058 = vsel %vm565, 0, %v1057
        %v1061 = vunpack.c.l.s4 1983009808
        %v1062 = vunpack.c.0.s8 %v1061
        %v1063 = vperm.slane %v1014, %v1062
        %v1066 = vunpack.c.l.s4 1983009808
        %v1067 = vunpack.c.0.s8 %v1066
        %v1068 = vperm.slane %v1020, %v1067
        %v1069 = vrot.slane %v1068, 4
        %v1070 = vsel %vm565, %v1069, %v1063
        %v1071 = vrot.slane %v1063, 4
        %v1072 = vsel %vm565, %v1068, %v1071
        %v1074 = vunpack.c.l.s4 1934713408
        %v1075 = vunpack.c.0.s8 %v1074
        %v1076 = vperm.slane %v1070, %v1075
        %v1078 = vunpack.c.l.s4 1934713408
        %v1079 = vunpack.c.0.s8 %v1078
        %v1080 = vperm.slane %v1072, %v1079
        %v1081 = vrot.slane %v1076, 4
        %v1082 = vsel %vm565, 0, %v1081
        %v1083 = vrot.slane %v1080, 4
        %v1084 = vsel %vm565, 0, %v1083
        %v1087 = vunpack.c.l.s4 1983009808
        %v1088 = vunpack.c.0.s8 %v1087
        %v1089 = vperm.slane %v1023, %v1088
        %v1092 = vunpack.c.l.s4 1983009808
        %v1093 = vunpack.c.0.s8 %v1092
        %v1094 = vperm.slane %v1029, %v1093
        %v1095 = vrot.slane %v1094, 4
        %v1096 = vsel %vm565, %v1095, %v1089
        %v1097 = vrot.slane %v1089, 4
        %v1098 = vsel %vm565, %v1094, %v1097
        %v1100 = vunpack.c.l.s4 1934713408
        %v1101 = vunpack.c.0.s8 %v1100
        %v1102 = vperm.slane %v1096, %v1101
        %v1104 = vunpack.c.l.s4 1934713408
        %v1105 = vunpack.c.0.s8 %v1104
        %v1106 = vperm.slane %v1098, %v1105
        %v1107 = vrot.slane %v1102, 4
        %v1108 = vsel %vm565, 0, %v1107
        %v1109 = vrot.slane %v1106, 4
        %v1110 = vsel %vm565, 0, %v1109
        %v1113 = vunpack.c.l.s4 1983009808
        %v1114 = vunpack.c.0.s8 %v1113
        %v1115 = vperm.slane %v1026, %v1114
        %v1118 = vunpack.c.l.s4 1983009808
        %v1119 = vunpack.c.0.s8 %v1118
        %v1120 = vperm.slane %v1032, %v1119
        %v1121 = vrot.slane %v1120, 4
        %v1122 = vsel %vm565, %v1121, %v1115
        %v1123 = vrot.slane %v1115, 4
        %v1124 = vsel %vm565, %v1120, %v1123
        %v1126 = vunpack.c.l.s4 1934713408
        %v1127 = vunpack.c.0.s8 %v1126
        %v1128 = vperm.slane %v1122, %v1127
        %v1130 = vunpack.c.l.s4 1934713408
        %v1131 = vunpack.c.0.s8 %v1130
        %v1132 = vperm.slane %v1124, %v1131
        %v1133 = vrot.slane %v1128, 4
        %v1134 = vsel %vm565, 0, %v1133
        %v1135 = vrot.slane %v1132, 4
        %v1136 = vsel %vm565, 0, %v1135
        %v1137 = vsel %vm565, %v1057, %v1050
        %v1139 = vunpack.c.l.s4 1983009808
        %v1140 = vunpack.c.0.s8 %v1139
        %v1141 = vperm.slane %v1137, %v1140
        %v1142 = vrot.slane %v1058, 4
        %v1143 = vsel %vm565, %v1142, %v1056
        %v1145 = vunpack.c.l.s4 1983009808
        %v1146 = vunpack.c.0.s8 %v1145
        %v1147 = vperm.slane %v1143, %v1146
        %v1148 = vrot.slane %v1147, 4
        %v1149 = vsel %vm565, %v1148, %v1141
        %v1151 = vunpack.c.l.s4 1934713408
        %v1152 = vunpack.c.0.s8 %v1151
        %v1153 = vperm.slane %v1149, %v1152
        %v1154 = vrot.slane %v1153, 4
        %v1155 = vsel %vm565, 0, %v1154
        %v1156 = vsel %vm565, %v1083, %v1076
        %v1158 = vunpack.c.l.s4 1983009808
        %v1159 = vunpack.c.0.s8 %v1158
        %v1160 = vperm.slane %v1156, %v1159
        %v1161 = vrot.slane %v1084, 4
        %v1162 = vsel %vm565, %v1161, %v1082
        %v1164 = vunpack.c.l.s4 1983009808
        %v1165 = vunpack.c.0.s8 %v1164
        %v1166 = vperm.slane %v1162, %v1165
        %v1167 = vrot.slane %v1166, 4
        %v1168 = vsel %vm565, %v1167, %v1160
        %v1170 = vunpack.c.l.s4 1934713408
        %v1171 = vunpack.c.0.s8 %v1170
        %v1172 = vperm.slane %v1168, %v1171
        %v1173 = vrot.slane %v1172, 4
        %v1174 = vsel %vm565, 0, %v1173
        %v1175 = vsel %vm565, %v1109, %v1102
        %v1177 = vunpack.c.l.s4 1983009808
        %v1178 = vunpack.c.0.s8 %v1177
        %v1179 = vperm.slane %v1175, %v1178
        %v1180 = vrot.slane %v1110, 4
        %v1181 = vsel %vm565, %v1180, %v1108
        %v1183 = vunpack.c.l.s4 1983009808
        %v1184 = vunpack.c.0.s8 %v1183
        %v1185 = vperm.slane %v1181, %v1184
        %v1186 = vrot.slane %v1185, 4
        %v1187 = vsel %vm565, %v1186, %v1179
        %v1189 = vunpack.c.l.s4 1934713408
        %v1190 = vunpack.c.0.s8 %v1189
        %v1191 = vperm.slane %v1187, %v1190
        %v1192 = vrot.slane %v1191, 4
        %v1193 = vsel %vm565, 0, %v1192
        %v1194 = vsel %vm565, %v1135, %v1128
        %v1196 = vunpack.c.l.s4 1983009808
        %v1197 = vunpack.c.0.s8 %v1196
        %v1198 = vperm.slane %v1194, %v1197
        %v1199 = vrot.slane %v1136, 4
        %v1200 = vsel %vm565, %v1199, %v1134
        %v1202 = vunpack.c.l.s4 1983009808
        %v1203 = vunpack.c.0.s8 %v1202
        %v1204 = vperm.slane %v1200, %v1203
        %v1205 = vrot.slane %v1204, 4
        %v1206 = vsel %vm565, %v1205, %v1198
        %v1208 = vunpack.c.l.s4 1934713408
        %v1209 = vunpack.c.0.s8 %v1208
        %v1210 = vperm.slane %v1206, %v1209
        %v1211 = vrot.slane %v1210, 4
        %v1212 = vsel %vm565, 0, %v1211
        %v1215 = vpack.i.b16 %v1172, %v1153
        %v1216 = vshrl.u32 %v1153, 16
        %v1217 = vshrl.u32 %v1172, 16
        %v1218 = vpack.i.b16 %v1217, %v1216
        %v1221 = vpack.i.b16 %v1174, %v1155
        %v1222 = vshrl.u32 %v1155, 16
        %v1223 = vshrl.u32 %v1174, 16
        %v1224 = vpack.i.b16 %v1223, %v1222
        %v1227 = vpack.i.b16 %v1210, %v1191
        %v1228 = vshrl.u32 %v1191, 16
        %v1229 = vshrl.u32 %v1210, 16
        %v1230 = vpack.i.b16 %v1229, %v1228
        %v1233 = vpack.i.b16 %v1212, %v1193
        %v1234 = vshrl.u32 %v1193, 16
        %v1235 = vshrl.u32 %v1212, 16
        %v1236 = vpack.i.b16 %v1235, %v1234
        %v1237 = vunpack.c.l.b16 %v737
        %v1238 = vunpack.c.l.b16 %v749
        %v1239 = vpack.c.b16 %v1238, %v1237
        %v1240 = vunpack.c.l.b16 %v973
        %v1241 = vunpack.c.l.b16 %v985
        %v1242 = vpack.c.b16 %v1241, %v1240
        %vm1243 = vcmask 261120
        %v1245 = vsel %vm1243, %v1239, 0
        %v1248 = vsel %vm1243, %v1242, 0
        %1250 = vmatpush.bf16.xpose.msra.mxu0 0
        %1251 = vmatpush.bf16.xpose.msra.mxu0 0
        %1252 = vmatpush.bf16.xpose.msra.mxu0 0
        %1253 = vmatpush.bf16.xpose.msra.mxu0 0
        %1254 = vmatpush.bf16.xpose.msra.mxu0 0
        %1255 = vmatpush.bf16.xpose.msra.mxu0 0
        %1256 = vmatpush.bf16.xpose.msra.mxu0 0
        %1257 = vmatpush.bf16.xpose.msra.mxu0 %v1248
        %1258 = vmatmul.bf16.gmra.mxu0 %v1245
        %v1259 = vpop.f32.mrf.mxu0
        %v1260 = vadd.f32 0.0, %v1259
        %v1261 = vpop.f32.mrf.mxu0
        %v1262 = vadd.f32 0.0, %v1261
        %1263 = vdwg.mxu0
        %v1264 = vunpack.c.l.b16 %v740
        %v1265 = vunpack.c.l.b16 %v752
        %v1266 = vpack.c.b16 %v1265, %v1264
        %v1267 = vunpack.c.l.b16 %v976
        %v1268 = vunpack.c.l.b16 %v988
        %v1269 = vpack.c.b16 %v1268, %v1267
        %v1271 = vsel %vm1243, %v1266, 0
        %v1274 = vsel %vm1243, %v1269, 0
        %1276 = vmatpush.bf16.xpose.msra.mxu0 0
        %1277 = vmatpush.bf16.xpose.msra.mxu0 0
        %1278 = vmatpush.bf16.xpose.msra.mxu0 0
        %1279 = vmatpush.bf16.xpose.msra.mxu0 0
        %1280 = vmatpush.bf16.xpose.msra.mxu0 0
        %1281 = vmatpush.bf16.xpose.msra.mxu0 0
        %1282 = vmatpush.bf16.xpose.msra.mxu0 0
        %1283 = vmatpush.bf16.xpose.msra.mxu0 %v1274
        %1284 = vmatmul.bf16.gmra.mxu0 %v1271
        %v1285 = vpop.f32.mrf.mxu0
        %v1286 = vadd.f32 0.0, %v1285
        %v1287 = vpop.f32.mrf.mxu0
        %v1288 = vadd.f32 0.0, %v1287
        %1289 = vdwg.mxu0
        %v1290 = vunpack.c.l.b16 %v743
        %v1291 = vunpack.c.l.b16 %v755
        %v1292 = vpack.c.b16 %v1291, %v1290
        %v1293 = vunpack.c.l.b16 %v979
        %v1294 = vunpack.c.l.b16 %v991
        %v1295 = vpack.c.b16 %v1294, %v1293
        %v1297 = vsel %vm1243, %v1292, 0
        %v1300 = vsel %vm1243, %v1295, 0
        %1302 = vmatpush.bf16.xpose.msra.mxu0 0
        %1303 = vmatpush.bf16.xpose.msra.mxu0 0
        %1304 = vmatpush.bf16.xpose.msra.mxu0 0
        %1305 = vmatpush.bf16.xpose.msra.mxu0 0
        %1306 = vmatpush.bf16.xpose.msra.mxu0 0
        %1307 = vmatpush.bf16.xpose.msra.mxu0 0
        %1308 = vmatpush.bf16.xpose.msra.mxu0 0
        %1309 = vmatpush.bf16.xpose.msra.mxu0 %v1300
        %1310 = vmatmul.bf16.gmra.mxu0 %v1297
        %v1311 = vpop.f32.mrf.mxu0
        %v1312 = vadd.f32 0.0, %v1311
        %v1313 = vpop.f32.mrf.mxu0
        %v1314 = vadd.f32 0.0, %v1313
        %1315 = vdwg.mxu0
        %v1316 = vunpack.c.l.b16 %v746
        %v1317 = vunpack.c.l.b16 %v758
        %v1318 = vpack.c.b16 %v1317, %v1316
        %v1319 = vunpack.c.l.b16 %v982
        %v1320 = vunpack.c.l.b16 %v994
        %v1321 = vpack.c.b16 %v1320, %v1319
        %v1323 = vsel %vm1243, %v1318, 0
        %v1326 = vsel %vm1243, %v1321, 0
        %1328 = vmatpush.bf16.xpose.msra.mxu0 0
        %1329 = vmatpush.bf16.xpose.msra.mxu0 0
        %1330 = vmatpush.bf16.xpose.msra.mxu0 0
        %1331 = vmatpush.bf16.xpose.msra.mxu0 0
        %1332 = vmatpush.bf16.xpose.msra.mxu0 0
        %1333 = vmatpush.bf16.xpose.msra.mxu0 0
        %1334 = vmatpush.bf16.xpose.msra.mxu0 0
        %1335 = vmatpush.bf16.xpose.msra.mxu0 %v1326
        %1336 = vmatmul.bf16.gmra.mxu0 %v1323
        %v1337 = vpop.f32.mrf.mxu0
        %v1338 = vadd.f32 0.0, %v1337
        %v1339 = vpop.f32.mrf.mxu0
        %v1340 = vadd.f32 0.0, %v1339
        %1341 = vdwg.mxu0
        %vm1342 = vcmask 130048
        %v1343 = vsel %vm1342, %v1260, -inf
        %1344 = vmax.xlane.f32.xlu0 %v1343
        %v1345 = vpop.xlane.xlu0 %1344
        %v1346 = vsel %vm1342, %v1262, -inf
        %1347 = vmax.xlane.f32.xlu0 %v1346
        %v1348 = vpop.xlane.xlu0 %1347
        %v1349 = vsel %vm1342, %v1286, -inf
        %1350 = vmax.xlane.f32.xlu0 %v1349
        %v1351 = vpop.xlane.xlu0 %1350
        %v1352 = vsel %vm1342, %v1288, -inf
        %1353 = vmax.xlane.f32.xlu0 %v1352
        %v1354 = vpop.xlane.xlu0 %1353
        %v1355 = vsel %vm1342, %v1312, -inf
        %1356 = vmax.xlane.f32.xlu0 %v1355
        %v1357 = vpop.xlane.xlu0 %1356
        %v1358 = vsel %vm1342, %v1314, -inf
        %1359 = vmax.xlane.f32.xlu0 %v1358
        %v1360 = vpop.xlane.xlu0 %1359
        %v1361 = vsel %vm1342, %v1338, -inf
        %1362 = vmax.xlane.f32.xlu0 %v1361
        %v1363 = vpop.xlane.xlu0 %1362
        %v1364 = vsel %vm1342, %v1340, -inf
        %1365 = vmax.xlane.f32.xlu0 %v1364
        %v1366 = vpop.xlane.xlu0 %1365
        %v1367 = vsub.f32 %v1260, %v1345
        %v1368 = vsub.f32 %v1262, %v1348
        %v1369 = vsub.f32 %v1286, %v1351
        %v1370 = vsub.f32 %v1288, %v1354
        %v1371 = vsub.f32 %v1312, %v1357
        %v1372 = vsub.f32 %v1314, %v1360
        %v1373 = vsub.f32 %v1338, %v1363
        %v1374 = vsub.f32 %v1340, %v1366
        %v1375 = vmul.f32 %v1367, 1.442695
        %v1376 = vpow.pop %v1375
        %v1377 = vmul.f32 %v1368, 1.442695
        %v1378 = vpow.pop %v1377
        %v1379 = vmul.f32 %v1369, 1.442695
        %v1380 = vpow.pop %v1379
        %v1381 = vmul.f32 %v1370, 1.442695
        %v1382 = vpow.pop %v1381
        %v1383 = vmul.f32 %v1371, 1.442695
        %v1384 = vpow.pop %v1383
        %v1385 = vmul.f32 %v1372, 1.442695
        %v1386 = vpow.pop %v1385
        %v1387 = vmul.f32 %v1373, 1.442695
        %v1388 = vpow.pop %v1387
        %v1389 = vmul.f32 %v1374, 1.442695
        %v1390 = vpow.pop %v1389
        %v1391 = vsel %vm1342, %v1376, 0.0
        %1392 = vadd.xlane.f32.xlu0 %v1391
        %v1393 = vpop.xlane.xlu0 %1392
        %v1394 = vsel %vm1342, %v1378, 0.0
        %1395 = vadd.xlane.f32.xlu0 %v1394
        %v1396 = vpop.xlane.xlu0 %1395
        %v1397 = vsel %vm1342, %v1380, 0.0
        %1398 = vadd.xlane.f32.xlu0 %v1397
        %v1399 = vpop.xlane.xlu0 %1398
        %v1400 = vsel %vm1342, %v1382, 0.0
        %1401 = vadd.xlane.f32.xlu0 %v1400
        %v1402 = vpop.xlane.xlu0 %1401
        %v1403 = vsel %vm1342, %v1384, 0.0
        %1404 = vadd.xlane.f32.xlu0 %v1403
        %v1405 = vpop.xlane.xlu0 %1404
        %v1406 = vsel %vm1342, %v1386, 0.0
        %1407 = vadd.xlane.f32.xlu0 %v1406
        %v1408 = vpop.xlane.xlu0 %1407
        %v1409 = vsel %vm1342, %v1388, 0.0
        %1410 = vadd.xlane.f32.xlu0 %v1409
        %v1411 = vpop.xlane.xlu0 %1410
        %v1412 = vsel %vm1342, %v1390, 0.0
        %1413 = vadd.xlane.f32.xlu0 %v1412
        %v1414 = vpop.xlane.xlu0 %1413
        %v1415 = vrcp.pop %v1393
        %v1416 = vrcp.pop %v1396
        %v1417 = vrcp.pop %v1399
        %v1418 = vrcp.pop %v1402
        %v1419 = vrcp.pop %v1405
        %v1420 = vrcp.pop %v1408
        %v1421 = vrcp.pop %v1411
        %v1422 = vrcp.pop %v1414
        %v1423 = vmul.f32 %v1376, %v1415
        %v1424 = vmul.f32 %v1378, %v1416
        %v1425 = vmul.f32 %v1380, %v1417
        %v1426 = vmul.f32 %v1382, %v1418
        %v1427 = vmul.f32 %v1384, %v1419
        %v1428 = vmul.f32 %v1386, %v1420
        %v1429 = vmul.f32 %v1388, %v1421
        %v1430 = vmul.f32 %v1390, %v1422
        %v1431 = vpack.c.bf16 %v1423, %v1423
        %v1432 = vpack.c.bf16 %v1424, %v1424
        %v1433 = vpack.c.bf16 %v1425, %v1425
        %v1434 = vpack.c.bf16 %v1426, %v1426
        %v1435 = vpack.c.bf16 %v1427, %v1427
        %v1436 = vpack.c.bf16 %v1428, %v1428
        %v1437 = vpack.c.bf16 %v1429, %v1429
        %v1438 = vpack.c.bf16 %v1430, %v1430
        %v1441 = vunpack.c.l.b16 %v1431
        %v1442 = vunpack.c.l.b16 %v1432
        %v1443 = vpack.c.b16 %v1442, %v1441
        %v1444 = vunpack.c.l.b16 %v1215
        %v1445 = vunpack.c.l.b16 %v1227
        %v1446 = vpack.c.b16 %v1445, %v1444
        %v1449 = vsel %vm1342, %v1443, 0
        %1451 = vmatpush.bf16.msra.mxu0 0
        %1452 = vmatpush.bf16.msra.mxu0 0
        %1453 = vmatpush.bf16.msra.mxu0 0
        %1454 = vmatpush.bf16.msra.mxu0 0
        %1455 = vmatpush.bf16.msra.mxu0 0
        %1456 = vmatpush.bf16.msra.mxu0 0
        %1457 = vmatpush.bf16.msra.mxu0 0
        %1458 = vmatpush.bf16.msra.mxu0 %v1446
        %1459 = vmatmul.bf16.gmra.mxu0 %v1449
        %v1460 = vpop.f32.mrf.mxu0
        %v1461 = vadd.f32 0.0, %v1460
        %v1462 = vpop.f32.mrf.mxu0
        %v1463 = vadd.f32 0.0, %v1462
        %1464 = vdwg.mxu0
        %v1467 = vunpack.c.l.b16 %v1433
        %v1468 = vunpack.c.l.b16 %v1434
        %v1469 = vpack.c.b16 %v1468, %v1467
        %v1470 = vunpack.c.l.b16 %v1218
        %v1471 = vunpack.c.l.b16 %v1230
        %v1472 = vpack.c.b16 %v1471, %v1470
        %v1475 = vsel %vm1342, %v1469, 0
        %1477 = vmatpush.bf16.msra.mxu0 0
        %1478 = vmatpush.bf16.msra.mxu0 0
        %1479 = vmatpush.bf16.msra.mxu0 0
        %1480 = vmatpush.bf16.msra.mxu0 0
        %1481 = vmatpush.bf16.msra.mxu0 0
        %1482 = vmatpush.bf16.msra.mxu0 0
        %1483 = vmatpush.bf16.msra.mxu0 0
        %1484 = vmatpush.bf16.msra.mxu0 %v1472
        %1485 = vmatmul.bf16.gmra.mxu0 %v1475
        %v1486 = vpop.f32.mrf.mxu0
        %v1487 = vadd.f32 0.0, %v1486
        %v1488 = vpop.f32.mrf.mxu0
        %v1489 = vadd.f32 0.0, %v1488
        %1490 = vdwg.mxu0
        %v1493 = vunpack.c.l.b16 %v1435
        %v1494 = vunpack.c.l.b16 %v1436
        %v1495 = vpack.c.b16 %v1494, %v1493
        %v1496 = vunpack.c.l.b16 %v1221
        %v1497 = vunpack.c.l.b16 %v1233
        %v1498 = vpack.c.b16 %v1497, %v1496
        %v1501 = vsel %vm1342, %v1495, 0
        %1503 = vmatpush.bf16.msra.mxu0 0
        %1504 = vmatpush.bf16.msra.mxu0 0
        %1505 = vmatpush.bf16.msra.mxu0 0
        %1506 = vmatpush.bf16.msra.mxu0 0
        %1507 = vmatpush.bf16.msra.mxu0 0
        %1508 = vmatpush.bf16.msra.mxu0 0
        %1509 = vmatpush.bf16.msra.mxu0 0
        %1510 = vmatpush.bf16.msra.mxu0 %v1498
        %1511 = vmatmul.bf16.gmra.mxu0 %v1501
        %v1512 = vpop.f32.mrf.mxu0
        %v1513 = vadd.f32 0.0, %v1512
        %v1514 = vpop.f32.mrf.mxu0
        %v1515 = vadd.f32 0.0, %v1514
        %1516 = vdwg.mxu0
        %v1519 = vunpack.c.l.b16 %v1437
        %v1520 = vunpack.c.l.b16 %v1438
        %v1521 = vpack.c.b16 %v1520, %v1519
        %v1522 = vunpack.c.l.b16 %v1224
        %v1523 = vunpack.c.l.b16 %v1236
        %v1524 = vpack.c.b16 %v1523, %v1522
        %v1527 = vsel %vm1342, %v1521, 0
        %1529 = vmatpush.bf16.msra.mxu0 0
        %1530 = vmatpush.bf16.msra.mxu0 0
        %1531 = vmatpush.bf16.msra.mxu0 0
        %1532 = vmatpush.bf16.msra.mxu0 0
        %1533 = vmatpush.bf16.msra.mxu0 0
        %1534 = vmatpush.bf16.msra.mxu0 0
        %1535 = vmatpush.bf16.msra.mxu0 0
        %1536 = vmatpush.bf16.msra.mxu0 %v1524
        %1537 = vmatmul.bf16.gmra.mxu0 %v1527
        %v1538 = vpop.f32.mrf.mxu0
        %v1539 = vadd.f32 0.0, %v1538
        %v1540 = vpop.f32.mrf.mxu0
        %v1541 = vadd.f32 0.0, %v1540
        %1542 = vdwg.mxu0
        %v1543 = vpack.c.bf16 %v1461, %v1461
        %v1544 = vpack.c.bf16 %v1463, %v1463
        %v1545 = vpack.c.bf16 %v1487, %v1487
        %v1546 = vpack.c.bf16 %v1489, %v1489
        %v1547 = vpack.c.bf16 %v1513, %v1513
        %v1548 = vpack.c.bf16 %v1515, %v1515
        %v1549 = vpack.c.bf16 %v1539, %v1539
        %v1550 = vpack.c.bf16 %v1541, %v1541
        %v1553 = vpack.i.b16 %v1545, %v1543
        %v1554 = vshrl.u32 %v1543, 16
        %v1555 = vshrl.u32 %v1545, 16
        %v1556 = vpack.i.b16 %v1555, %v1554
        %v1559 = vpack.i.b16 %v1549, %v1547
        %v1560 = vshrl.u32 %v1547, 16
        %v1561 = vshrl.u32 %v1549, 16
        %v1562 = vpack.i.b16 %v1561, %v1560
        %v1565 = vpack.i.b16 %v1546, %v1544
        %v1566 = vshrl.u32 %v1544, 16
        %v1567 = vshrl.u32 %v1546, 16
        %v1568 = vpack.i.b16 %v1567, %v1566
        %v1571 = vpack.i.b16 %v1550, %v1548
        %v1572 = vshrl.u32 %v1548, 16
        %v1573 = vshrl.u32 %v1550, 16
        %v1574 = vpack.i.b16 %v1573, %v1572
        %v1577 = vunpack.c.l.s4 1983009808
        %v1578 = vunpack.c.0.s8 %v1577
        %v1579 = vperm.slane %v1553, %v1578
        %v1582 = vunpack.c.l.s4 1983009808
        %v1583 = vunpack.c.0.s8 %v1582
        %v1584 = vperm.slane %v1559, %v1583
        %v1585 = vrot.slane %v1584, 4
        %v1586 = vsel %vm565, %v1585, %v1579
        %v1587 = vrot.slane %v1579, 4
        %v1588 = vsel %vm565, %v1584, %v1587
        %v1590 = vunpack.c.l.s4 1934713408
        %v1591 = vunpack.c.0.s8 %v1590
        %v1592 = vperm.slane %v1586, %v1591
        %v1594 = vunpack.c.l.s4 1934713408
        %v1595 = vunpack.c.0.s8 %v1594
        %v1596 = vperm.slane %v1588, %v1595
        %v1597 = vrot.slane %v1592, 4
        %v1598 = vsel %vm565, 0, %v1597
        %v1599 = vrot.slane %v1596, 4
        %v1600 = vsel %vm565, 0, %v1599
        %v1603 = vunpack.c.l.s4 1983009808
        %v1604 = vunpack.c.0.s8 %v1603
        %v1605 = vperm.slane %v1556, %v1604
        %v1608 = vunpack.c.l.s4 1983009808
        %v1609 = vunpack.c.0.s8 %v1608
        %v1610 = vperm.slane %v1562, %v1609
        %v1611 = vrot.slane %v1610, 4
        %v1612 = vsel %vm565, %v1611, %v1605
        %v1613 = vrot.slane %v1605, 4
        %v1614 = vsel %vm565, %v1610, %v1613
        %v1616 = vunpack.c.l.s4 1934713408
        %v1617 = vunpack.c.0.s8 %v1616
        %v1618 = vperm.slane %v1612, %v1617
        %v1620 = vunpack.c.l.s4 1934713408
        %v1621 = vunpack.c.0.s8 %v1620
        %v1622 = vperm.slane %v1614, %v1621
        %v1623 = vrot.slane %v1618, 4
        %v1624 = vsel %vm565, 0, %v1623
        %v1625 = vrot.slane %v1622, 4
        %v1626 = vsel %vm565, 0, %v1625
        %v1629 = vunpack.c.l.s4 1983009808
        %v1630 = vunpack.c.0.s8 %v1629
        %v1631 = vperm.slane %v1565, %v1630
        %v1634 = vunpack.c.l.s4 1983009808
        %v1635 = vunpack.c.0.s8 %v1634
        %v1636 = vperm.slane %v1571, %v1635
        %v1637 = vrot.slane %v1636, 4
        %v1638 = vsel %vm565, %v1637, %v1631
        %v1639 = vrot.slane %v1631, 4
        %v1640 = vsel %vm565, %v1636, %v1639
        %v1642 = vunpack.c.l.s4 1934713408
        %v1643 = vunpack.c.0.s8 %v1642
        %v1644 = vperm.slane %v1638, %v1643
        %v1646 = vunpack.c.l.s4 1934713408
        %v1647 = vunpack.c.0.s8 %v1646
        %v1648 = vperm.slane %v1640, %v1647
        %v1649 = vrot.slane %v1644, 4
        %v1650 = vsel %vm565, 0, %v1649
        %v1651 = vrot.slane %v1648, 4
        %v1652 = vsel %vm565, 0, %v1651
        %v1655 = vunpack.c.l.s4 1983009808
        %v1656 = vunpack.c.0.s8 %v1655
        %v1657 = vperm.slane %v1568, %v1656
        %v1660 = vunpack.c.l.s4 1983009808
        %v1661 = vunpack.c.0.s8 %v1660
        %v1662 = vperm.slane %v1574, %v1661
        %v1663 = vrot.slane %v1662, 4
        %v1664 = vsel %vm565, %v1663, %v1657
        %v1665 = vrot.slane %v1657, 4
        %v1666 = vsel %vm565, %v1662, %v1665
        %v1668 = vunpack.c.l.s4 1934713408
        %v1669 = vunpack.c.0.s8 %v1668
        %v1670 = vperm.slane %v1664, %v1669
        %v1672 = vunpack.c.l.s4 1934713408
        %v1673 = vunpack.c.0.s8 %v1672
        %v1674 = vperm.slane %v1666, %v1673
        %v1675 = vrot.slane %v1670, 4
        %v1676 = vsel %vm565, 0, %v1675
        %v1677 = vrot.slane %v1674, 4
        %v1678 = vsel %vm565, 0, %v1677
        %v1679 = vsel %vm565, %v1599, %v1592
        %v1681 = vunpack.c.l.s4 1983009808
        %v1682 = vunpack.c.0.s8 %v1681
        %v1683 = vperm.slane %v1679, %v1682
        %v1684 = vrot.slane %v1600, 4
        %v1685 = vsel %vm565, %v1684, %v1598
        %v1687 = vunpack.c.l.s4 1983009808
        %v1688 = vunpack.c.0.s8 %v1687
        %v1689 = vperm.slane %v1685, %v1688
        %v1690 = vrot.slane %v1689, 4
        %v1691 = vsel %vm565, %v1690, %v1683
        %v1693 = vunpack.c.l.s4 1934713408
        %v1694 = vunpack.c.0.s8 %v1693
        %v1695 = vperm.slane %v1691, %v1694
        %v1696 = vrot.slane %v1695, 4
        %v1697 = vsel %vm565, 0, %v1696
        %v1698 = vsel %vm565, %v1625, %v1618
        %v1700 = vunpack.c.l.s4 1983009808
        %v1701 = vunpack.c.0.s8 %v1700
        %v1702 = vperm.slane %v1698, %v1701
        %v1703 = vrot.slane %v1626, 4
        %v1704 = vsel %vm565, %v1703, %v1624
        %v1706 = vunpack.c.l.s4 1983009808
        %v1707 = vunpack.c.0.s8 %v1706
        %v1708 = vperm.slane %v1704, %v1707
        %v1709 = vrot.slane %v1708, 4
        %v1710 = vsel %vm565, %v1709, %v1702
        %v1712 = vunpack.c.l.s4 1934713408
        %v1713 = vunpack.c.0.s8 %v1712
        %v1714 = vperm.slane %v1710, %v1713
        %v1715 = vrot.slane %v1714, 4
        %v1716 = vsel %vm565, 0, %v1715
        %v1717 = vsel %vm565, %v1651, %v1644
        %v1719 = vunpack.c.l.s4 1983009808
        %v1720 = vunpack.c.0.s8 %v1719
        %v1721 = vperm.slane %v1717, %v1720
        %v1722 = vrot.slane %v1652, 4
        %v1723 = vsel %vm565, %v1722, %v1650
        %v1725 = vunpack.c.l.s4 1983009808
        %v1726 = vunpack.c.0.s8 %v1725
        %v1727 = vperm.slane %v1723, %v1726
        %v1728 = vrot.slane %v1727, 4
        %v1729 = vsel %vm565, %v1728, %v1721
        %v1731 = vunpack.c.l.s4 1934713408
        %v1732 = vunpack.c.0.s8 %v1731
        %v1733 = vperm.slane %v1729, %v1732
        %v1734 = vrot.slane %v1733, 4
        %v1735 = vsel %vm565, 0, %v1734
        %v1736 = vsel %vm565, %v1677, %v1670
        %v1738 = vunpack.c.l.s4 1983009808
        %v1739 = vunpack.c.0.s8 %v1738
        %v1740 = vperm.slane %v1736, %v1739
        %v1741 = vrot.slane %v1678, 4
        %v1742 = vsel %vm565, %v1741, %v1676
        %v1744 = vunpack.c.l.s4 1983009808
        %v1745 = vunpack.c.0.s8 %v1744
        %v1746 = vperm.slane %v1742, %v1745
        %v1747 = vrot.slane %v1746, 4
        %v1748 = vsel %vm565, %v1747, %v1740
        %v1750 = vunpack.c.l.s4 1934713408
        %v1751 = vunpack.c.0.s8 %v1750
        %v1752 = vperm.slane %v1748, %v1751
        %v1753 = vrot.slane %v1752, 4
        %v1754 = vsel %vm565, 0, %v1753
        %v1757 = vpack.i.b16 %v1714, %v1695
        %v1758 = vshrl.u32 %v1695, 16
        %v1759 = vshrl.u32 %v1714, 16
        %v1760 = vpack.i.b16 %v1759, %v1758
        %v1763 = vpack.i.b16 %v1716, %v1697
        %v1764 = vshrl.u32 %v1697, 16
        %v1765 = vshrl.u32 %v1716, 16
        %v1766 = vpack.i.b16 %v1765, %v1764
        %v1769 = vpack.i.b16 %v1752, %v1733
        %v1770 = vshrl.u32 %v1733, 16
        %v1771 = vshrl.u32 %v1752, 16
        %v1772 = vpack.i.b16 %v1771, %v1770
        %v1775 = vpack.i.b16 %v1754, %v1735
        %v1776 = vshrl.u32 %v1735, 16
        %v1777 = vshrl.u32 %v1754, 16
        %v1778 = vpack.i.b16 %v1777, %v1776
        %v1779 = vunpack.c.l.b16 %v1757
        %v1780 = vunpack.c.l.b16 %v1769
        %v1781 = vpack.c.b16 %v1780, %v1779
        %v1782 = vunpack.c.l.b16 %v1760
        %v1783 = vunpack.c.l.b16 %v1772
        %v1784 = vpack.c.b16 %v1783, %v1782
        %1785 = vrot.lane.b32.xlu0 %v1784, 32
        %v1786 = vpop.permute.xlu0 %1785
        %v1787 = vunpack.c.l.b16 %v1763
        %v1788 = vunpack.c.l.b16 %v1775
        %v1789 = vpack.c.b16 %v1788, %v1787
        %1790 = vrot.lane.b32.xlu0 %v1789, 64
        %v1791 = vpop.permute.xlu0 %1790
        %v1792 = vunpack.c.l.b16 %v1766
        %v1793 = vunpack.c.l.b16 %v1778
        %v1794 = vpack.c.b16 %v1793, %v1792
        %1795 = vrot.lane.b32.xlu0 %v1794, 96
        %v1796 = vpop.permute.xlu0 %1795
        %v1799 = vsel %vm1243, %v1781, %v1786
        %vm1800 = vcmask 523264
        %v1802 = vsel %vm1800, %v1799, %v1791
        %vm1803 = vcmask 785408
        %v1805 = vsel %vm1803, %v1802, %v1796
        %v1807 = vld [vmem:[#allocation8] sm:$0xf]
        %v1808 = vld [vmem:[#allocation8 + $0x4] sm:$0xf]
        %v1809 = vld [vmem:[#allocation8 + $0x8] sm:$0xf]
        %v1810 = vld [vmem:[#allocation8 + $0xc] sm:$0xf]
        %v1811 = vld [vmem:[#allocation8 + $0x10] sm:$0xf]
        %v1812 = vld [vmem:[#allocation8 + $0x14] sm:$0xf]
        %v1813 = vld [vmem:[#allocation8 + $0x18] sm:$0xf]
        %v1814 = vld [vmem:[#allocation8 + $0x1c] sm:$0xf]
        %v1815 = vld [vmem:[#allocation8 + $0x20] sm:$0xf]
        %v1816 = vld [vmem:[#allocation8 + $0x24] sm:$0xf]
        %v1817 = vld [vmem:[#allocation8 + $0x28] sm:$0xf]
        %v1818 = vld [vmem:[#allocation8 + $0x2c] sm:$0xf]
        %v1819 = vld [vmem:[#allocation8 + $0x30] sm:$0xf]
        %v1820 = vld [vmem:[#allocation8 + $0x34] sm:$0xf]
        %v1821 = vld [vmem:[#allocation8 + $0x38] sm:$0xf]
        %v1822 = vld [vmem:[#allocation8 + $0x3c] sm:$0xf]
        %v1823 = vld [vmem:[%s4] sm:$0x1]
        %v1825 = vperm.slane %v1823, 0
        %v1843 = vunpack.c.l.b16 %v1807
        %v1844 = vunpack.c.l.b16 %v1808
        %v1845 = vunpack.c.l.b16 %v1809
        %v1846 = vunpack.c.l.b16 %v1810
        %v1847 = vunpack.c.l.b16 %v1811
        %v1848 = vunpack.c.l.b16 %v1812
        %v1849 = vunpack.c.l.b16 %v1813
        %v1850 = vunpack.c.l.b16 %v1814
        %v1851 = vunpack.c.l.b16 %v1815
        %v1852 = vunpack.c.l.b16 %v1816
        %v1853 = vunpack.c.l.b16 %v1817
        %v1854 = vunpack.c.l.b16 %v1818
        %v1855 = vunpack.c.l.b16 %v1819
        %v1856 = vunpack.c.l.b16 %v1820
        %v1857 = vunpack.c.l.b16 %v1821
        %v1858 = vunpack.c.l.b16 %v1822
        %v1859 = vpack.c.b16 %v1844, %v1843
        %v1860 = vpack.c.b16 %v1846, %v1845
        %v1861 = vpack.c.b16 %v1848, %v1847
        %v1862 = vpack.c.b16 %v1850, %v1849
        %v1863 = vpack.c.b16 %v1852, %v1851
        %v1864 = vpack.c.b16 %v1854, %v1853
        %v1865 = vpack.c.b16 %v1856, %v1855
        %v1866 = vpack.c.b16 %v1858, %v1857
        %1875 = vmatpush.bf16.msra.mxu0 %v1866
        %1876 = vmatpush.bf16.msra.mxu0 %v1865
        %1877 = vmatpush.bf16.msra.mxu0 %v1864
        %1878 = vmatpush.bf16.msra.mxu0 %v1863
        %1879 = vmatpush.bf16.msra.mxu0 %v1862
        %1880 = vmatpush.bf16.msra.mxu0 %v1861
        %1881 = vmatpush.bf16.msra.mxu0 %v1860
        %1882 = vmatpush.bf16.msra.mxu0 %v1859
        %1883 = vmatmul.bf16.gmra.mxu0 %v1805
        %v1884 = vpop.f32.mrf.mxu0
        %v1885 = vadd.f32 %v1825, %v1884
        %v1886 = vpop.f32.mrf.mxu0
        %v1887 = vadd.f32 %v1825, %v1886
        %1888 = vdwg.mxu0
        %1889 = vst [vmem:[%s292] sm:$0xff] %v1885
        %1890 = vst [vmem:[%s292 + $0x8] sm:$0xff] %v1887
        %s1891 = sand.u32 %s142, 1
        %s1892 = scalar_lea.sflag [#allocation4], %s1891
        %s1893 = sand.u32 %s142, 1
        %s1894 = smul.addr %s1893, 16
        %s1895 = scalar_lea.vmem [#allocation10], %s1894
        // Predicated region
        $region57: #{tpu_custom_call.1} parent=39 // pred_check
          %p1896 = pneg %p152
        $region58: #{tpu_custom_call.1} parent=39 // pred_check_branch
          %1898 = sbr.rel (%p1896) target = $region60
        $region59: #{tpu_custom_call.1} parent=39 // pred_region
          %1900 = vsyncadd %s1892, 0
          %s1901 = smul.addr %s24, 2
          %s1902 = smul.addr %s1901, 8
          %s1903 = scalar_lea.hbm %s5, %s1902
          %s1904 = sshll.u32 %s1895, 4
          %s1905 = int_to_ptr.vmem [resolvable:$true] %s1904
          %s1906 = sshll.u32 %s1903, 4
          %s1907 = int_to_ptr.hbm [resolvable:$true] %s1906
          %1912 = dma.vmem_to_hbm [thread:$0]  %s1905, 256, %s1907, %s1892, 128, 128, 8
        $region60: #{tpu_custom_call.1} parent=39 // pred_fallthru
          _
      $region40: #{tpu_custom_call.1} parent=5 // pred_fallthru
        _
      %p1913 = scmp.le.s32.totalorder 2, %s19
      // Predicated region
      $region61: #{tpu_custom_call.1} parent=5 // pred_check
        %p1914 = pneg %p1913
      $region62: #{tpu_custom_call.1} parent=5 // pred_check_branch
        %1916 = sbr.rel (%p1914) target = $region64
      $region63: #{tpu_custom_call.1} parent=5 // pred_region
        %s1917 = ssub.s32 %s19, 2
        // Predicated region
        $region65: #{tpu_custom_call.1} parent=63 // pred_check
          %p1918 = pneg %p158
        $region66: #{tpu_custom_call.1} parent=63 // pred_check_branch
          %1920 = sbr.rel (%p1918) target = $region68
        $region67: #{tpu_custom_call.1} parent=63 // pred_region
          %s1921 = sand.u32 %s143, 1
          %s1922 = scalar_lea.sflag [#allocation4], %s1921
          %s1923 = sand.u32 %s143, 1
          %s1924 = smul.addr %s1923, 16
          %s1925 = scalar_lea.vmem [#allocation10], %s1924
          %1927 = dma.done %s1922, 256
        $region68: #{tpu_custom_call.1} parent=63 // pred_fallthru
          _
      $region64: #{tpu_custom_call.1} parent=5 // pred_fallthru
        _
    $region6: #{tpu_custom_call.1} parent=1 // loop_footer
      %s23 = sadd.s32 1, %s19
    $region7: #{tpu_custom_call.1} parent=1 // loop_footer_branch
      %18 = sbr.rel target = $region3
    $region8: #{tpu_custom_call.1} parent=1 // loop_exit
      _
    %1928 = vsyncpa [#allocation3], 1
    %s1929 = scalar_lea.sflag [#allocation3], 1
    %1930 = vsyncpa %s1929, 1
    %1931 = vsyncpa [#allocation6], 1
    %1932 = vsyncpa [#allocation9], 1
    %1933 = vsyncpa [#allocation4], 1
    %s1934 = scalar_lea.sflag [#allocation4], 1
    %1935 = vsyncpa %s1934, 1

</llo_original>
